<compile_context>
chip_gen: v5e
topology: v5e:2x2
jax: 0.10.0
libtpu: 0.0.40
codegen_flags: <defaults>
</compile_context>

<pallas_src>
import functools

import jax
import jax.numpy as jnp
from jax.experimental import pallas as pl
from jax.experimental.pallas import tpu as pltpu

LANE = 128   # channel / feature lane padding
EPS = 1e-5   # F.batch_norm default eps


# ----------------------------------------------------------------------------
# Pallas kernels
# ----------------------------------------------------------------------------
def _conv_bn_relu_pool_kernel(x_ref, w_ref, shift_ref, o_ref, *, tm):
    """Fused conv (im2col matmul) + inference-BN + ReLU + 2x2 max-pool.

    x_ref:     (4*tm, K) bf16 -- 4 pool-window-position row groups stacked
                                 along M (one MXU push for all of them).
    w_ref:     (K, 128) bf16  -- conv weights with the positive BN scale
                                 1/sqrt(var+eps) folded in; out-ch zero-padded.
    shift_ref: (1, 128) f32   -- (bias - mean) * inv_std, zero-padded.
    Since the folded scale is positive and the shift is per-channel constant,
    pool(relu(z*s + t)) == relu(max_window(z*s) + t).
    """
    r = jnp.dot(x_ref[...], w_ref[...], preferred_element_type=jnp.float32)
    # tm is a multiple of 8 (or the full extent), so these are aligned
    # sublane slices -- pure vreg selection, no relayout.
    m = jnp.maximum(jnp.maximum(r[0 * tm:1 * tm], r[1 * tm:2 * tm]),
                    jnp.maximum(r[2 * tm:3 * tm], r[3 * tm:4 * tm]))
    o_ref[...] = jnp.maximum(m + shift_ref[...], 0.0).astype(o_ref.dtype)


def _fc_head_kernel(x_ref, w1_ref, b1_ref, w2_ref, b2_ref, o_ref, acc_ref, *,
                    n_valid):
    """fc1 (K split over the grid, f32 VMEM accumulator) + ReLU + fc2 +
    log_softmax; padded class lanes >= n_valid are masked out of the LSE."""
    @pl.when(pl.program_id(0) == 0)
    def _():
        acc_ref[...] = jnp.zeros_like(acc_ref)

    acc_ref[...] += jnp.dot(x_ref[...], w1_ref[...],
                            preferred_element_type=jnp.float32)

    @pl.when(pl.program_id(0) == pl.num_programs(0) - 1)
    def _():
        h = jnp.maximum(acc_ref[...] + b1_ref[...], 0.0).astype(w2_ref.dtype)
        y = jnp.dot(h, w2_ref[...], preferred_element_type=jnp.float32)
        y = y + b2_ref[...]
        lane = jax.lax.broadcasted_iota(jnp.int32, y.shape, 1)
        y = jnp.where(lane < n_valid, y, -1e30)   # padded logits out of the LSE
        mx = jnp.max(y, axis=-1, keepdims=True)
        lse = mx + jnp.log(jnp.sum(jnp.exp(y - mx), axis=-1, keepdims=True))
        o_ref[...] = y - lse


# ----------------------------------------------------------------------------
# pallas_call wrappers
# ----------------------------------------------------------------------------
def _choose_tm(m):
    """Largest divisor of m that is <= 256 and a multiple of 8 (m itself if
    m <= 256).  Caps per-step VMEM (v7x: 64 MiB) independent of batch and gives
    the pipeline / v7x's two TensorCores multiple steps at larger batch."""
    if m <= 256:
        return m
    for tm in range(256, 0, -8):
        if m % tm == 0:
            return tm
    return m


def conv_bn_relu_pool(blocks, wmat, shift):
    """blocks: (4, M, K) bf16; returns (Mp, 128) bf16, Mp = M rounded up to 8.

    Rows 0..M-1 of the output are relu(pool(conv)*scale + shift) for the pooled
    output pixels in (n, ph, pw) row-major order; rows M..Mp-1 are padding.
    """
    _, M, K = blocks.shape
    NL = wmat.shape[1]
    Mp = ((M + 7) // 8) * 8
    if Mp != M:
        blocks = jnp.pad(blocks, ((0, 0), (0, Mp - M), (0, 0)))
    tm = _choose_tm(Mp)
    g = Mp // tm
    # Group rows per grid tile: (g, 4, tm, K) -> (g*4*tm, K) so each grid step
    # reads one contiguous rectangular block (free reshape when g == 1).
    x = jnp.transpose(blocks.reshape(4, g, tm, K), (1, 0, 2, 3))
    x = x.reshape(g * 4 * tm, K)

    kernel = functools.partial(_conv_bn_relu_pool_kernel, tm=tm)
    bytes_acc = (4 * Mp * K * blocks.dtype.itemsize
                 + K * NL * wmat.dtype.itemsize + NL * 4 + Mp * NL * 2)
    return pl.pallas_call(
        kernel,
        out_shape=jax.ShapeDtypeStruct((Mp, NL), jnp.bfloat16),
        grid=(g,),
        in_specs=[
            pl.BlockSpec((4 * tm, K), lambda i: (i, 0)),
            pl.BlockSpec((K, NL), lambda i: (0, 0)),   # constant -> DMA elided
            pl.BlockSpec((1, NL), lambda i: (0, 0)),
        ],
        out_specs=pl.BlockSpec((tm, NL), lambda i: (i, 0)),
        compiler_params=pltpu.CompilerParams(dimension_semantics=("parallel",)),
        cost_estimate=pl.CostEstimate(flops=2 * 4 * Mp * K * NL,
                                      transcendentals=0,
                                      bytes_accessed=int(bytes_acc)),
    )(x, wmat, shift)


def fc_head(x, w1, b1, w2, b2, n_valid):
    """log_softmax(relu(x @ w1 + b1) @ w2 + b2); fc1's K split over the grid."""
    M, K = x.shape
    H = w1.shape[1]
    C = w2.shape[1]
    tk = 128
    assert K % tk == 0
    nk = K // tk
    kernel = functools.partial(_fc_head_kernel, n_valid=n_valid)
    bytes_acc = (M * K + K * H + H * C) * 2 + (H + C + M * C) * 4
    return pl.pallas_call(
        kernel,
        out_shape=jax.ShapeDtypeStruct((M, C), jnp.float32),
        grid=(nk,),
        in_specs=[
            pl.BlockSpec((M, tk), lambda k: (0, k)),
            pl.BlockSpec((tk, H), lambda k: (k, 0)),
            pl.BlockSpec((1, H), lambda k: (0, 0)),
            pl.BlockSpec((H, C), lambda k: (0, 0)),
            pl.BlockSpec((1, C), lambda k: (0, 0)),
        ],
        out_specs=pl.BlockSpec((M, C), lambda k: (0, 0)),
        scratch_shapes=[pltpu.VMEM((M, H), jnp.float32)],
        compiler_params=pltpu.CompilerParams(dimension_semantics=("arbitrary",)),
        cost_estimate=pl.CostEstimate(flops=2 * M * K * H + 2 * M * H * C,
                                      transcendentals=2 * M * C,
                                      bytes_accessed=int(bytes_acc)),
    )(x, w1, b1, w2, b2)


# ----------------------------------------------------------------------------
# Glue: im2col grouped by 2x2 pool-window position (XLA, lane-dense, bf16)
# ----------------------------------------------------------------------------
def _im2col_pool_blocks(x, k):
    """x: (N, H, W, C) -> (4, N*PH*PW, k*k*C).

    Conv output is (OH, OW) = (H-k+1, W-k+1) (assumed even), (PH, PW) = half.
    Block b = 2*dh + dw holds the im2col rows of conv-output positions
    (2*ph + dh, 2*pw + dw); rows inside a block are (n, ph, pw) row-major and
    columns are ordered (ki, kj, c).
    """
    N, H, W, C = x.shape
    OH, OW = H - k + 1, W - k + 1
    PH, PW = OH // 2, OW // 2
    cols = [x[:, ki:ki + OH, kj:kj + OW, :] for ki in range(k) for kj in range(k)]
    p = jnp.concatenate(cols, axis=-1)                 # (N, OH, OW, k*k*C)
    p = p.reshape(N, PH, 2, PW, 2, k * k * C)
    p = jnp.transpose(p, (2, 4, 0, 1, 3, 5))           # (dh, dw, N, PH, PW, K)
    return p.reshape(4, N * PH * PW, k * k * C)


# ----------------------------------------------------------------------------
# One-time parameter packing: BN fold, lane padding, flatten-perm fold, bf16
# ----------------------------------------------------------------------------
def _fold_bn(wmat, bias, mean, var):
    inv = 1.0 / jnp.sqrt(var + EPS)
    w = wmat * inv[None, :]
    s = (bias - mean) * inv
    w = jnp.pad(w, ((0, 0), (0, LANE - w.shape[1])))
    s = jnp.pad(s, (0, LANE - s.shape[0])).reshape(1, LANE)
    return w, s


def prepare_params(p):
    bf16 = jnp.bfloat16

    # conv1: K = 1*5*5 = 25; no K pad (Mosaic pads sublanes/lanes internally).
    w1 = p["conv1_w"].reshape(10, 25).T                           # (25, 10)
    w1, s1 = _fold_bn(w1, p["conv1_b"], p["bn1_mean"], p["bn1_var"])  # (25,128)

    # conv2: im2col column order (ki, kj, c) with the real 10 channels: K = 90
    # (exactly one 128-lane contraction tile).
    w2 = jnp.transpose(p["conv2_w"], (2, 3, 1, 0)).reshape(90, 20)
    w2, s2 = _fold_bn(w2, p["conv2_b"], p["bn2_mean"], p["bn2_var"])  # (90,128)

    # fc1: fold kernel-side flatten order (s*20 + c) vs torch NCHW flatten
    # (c*25 + s) into the weight rows; pad 500 -> 512 on both sides.
    wf1 = p["fc1_w"].reshape(500, 20, 25)                         # (j, c, s)
    wf1 = jnp.transpose(wf1, (2, 1, 0)).reshape(500, 500)         # rows = s*20+c
    wf1 = jnp.pad(wf1, ((0, 12), (0, 12)))                        # (512, 512)
    bf1 = jnp.pad(p["fc1_b"], (0, 12)).reshape(1, 512)

    # fc2: (500, 10) -> (512, 128); bias -> (1, 128).
    wf2 = jnp.pad(p["fc2_w"].T, ((0, 12), (0, LANE - 10)))
    bf2 = jnp.pad(p["fc2_b"], (0, LANE - 10)).reshape(1, LANE)

    # MXU operands in bf16; shifts/biases stay f32 (added post-accumulation).
    return {"w1": w1.astype(bf16), "s1": s1,
            "w2": w2.astype(bf16), "s2": s2,
            "wf1": wf1.astype(bf16), "bf1": bf1,
            "wf2": wf2.astype(bf16), "bf2": bf2}


# ----------------------------------------------------------------------------
# Full ConvNet forward
# ----------------------------------------------------------------------------
def convnet_forward(x, q):
    """x: (N, 1, 28, 28) NCHW float32; q: prepare_params(...) output."""
    N = x.shape[0]
    # conv1 + bn1 + relu + pool1 -> (N*12*12, 128) bf16, channels on lanes.
    xh = jnp.transpose(x, (0, 2, 3, 1)).astype(jnp.bfloat16)  # (N, 28, 28, 1)
    blk1 = _im2col_pool_blocks(xh, 5)                         # (4, N*144, 25)
    pooled1 = conv_bn_relu_pool(blk1, q["w1"], q["s1"])       # (>=N*144, 128)

    # conv2 + bn2 + relu + pool2 -> (>=N*25, 128) bf16.
    h1 = pooled1[:N * 144].reshape(N, 12, 12, LANE)[:, :, :, :10]  # real 10 ch
    blk2 = _im2col_pool_blocks(h1, 3)                         # (4, N*25, 90)
    pooled2 = conv_bn_relu_pool(blk2, q["w2"], q["s2"])       # (>=N*25, 128)

    # TODO(synk): torch's `print(out.size())` is host-side debug I/O; omitted.
    # flatten (channel-last order; NCHW permutation folded into wf1) + fc head.
    flat = pooled2[:N * 25].reshape(N, 25, LANE)[:, :, :20].reshape(N, 500)
    flat = jnp.pad(flat, ((0, 0), (0, 12)))                   # (N, 512) bf16
    out = fc_head(flat, q["wf1"], q["bf1"], q["wf2"], q["bf2"], n_valid=10)
    return out[:, :10]


# ----------------------------------------------------------------------------
# Deterministic parameter init (shapes match the PyTorch module)
# ----------------------------------------------------------------------------
def init_params(key):
    ks = jax.random.split(key, 12)
    f32 = jnp.float32
    return {
        "conv1_w": jax.random.normal(ks[0], (10, 1, 5, 5), f32) * 0.1,
        "conv1_b": jax.random.normal(ks[1], (10,), f32) * 0.1,
        "bn1_mean": jax.random.normal(ks[2], (10,), f32),           # torch.randn(10)
        "bn1_var": jnp.abs(jax.random.normal(ks[3], (10,), f32)),   # .abs()
        "conv2_w": jax.random.normal(ks[4], (20, 10, 3, 3), f32) * 0.1,
        "conv2_b": jax.random.normal(ks[5], (20,), f32) * 0.1,
        "bn2_mean": jax.random.normal(ks[6], (20,), f32),
        "bn2_var": jnp.abs(jax.random.normal(ks[7], (20,), f32)),
        "fc1_w": jax.random.normal(ks[8], (500, 500), f32) * 0.05,
        "fc1_b": jax.random.normal(ks[9], (500,), f32) * 0.05,
        "fc2_w": jax.random.normal(ks[10], (10, 500), f32) * 0.05,
        "fc2_b": jax.random.normal(ks[11], (10,), f32) * 0.05,
    }


# ----------------------------------------------------------------------------
# Pure-JAX f32 reference (silent correctness check)
# ----------------------------------------------------------------------------
def ref_forward(x, p):
    def conv(y, w, b):
        out = jax.lax.conv_general_dilated(
            y, w, (1, 1), "VALID", dimension_numbers=("NCHW", "OIHW", "NCHW"))
        return out + b.reshape(1, -1, 1, 1)

    def bn(y, mean, var):
        return (y - mean.reshape(1, -1, 1, 1)) / jnp.sqrt(var.reshape(1, -1, 1, 1) + EPS)

    def pool(y):
        return jax.lax.reduce_window(y, -jnp.inf, jax.lax.max,
                                     (1, 1, 2, 2), (1, 1, 2, 2), "VALID")

    out = pool(jax.nn.relu(bn(conv(x, p["conv1_w"], p["conv1_b"]),
                              p["bn1_mean"], p["bn1_var"])))
    out = pool(jax.nn.relu(bn(conv(out, p["conv2_w"], p["conv2_b"]),
                              p["bn2_mean"], p["bn2_var"])))
    flat = out.reshape(x.shape[0], -1)
    h = jax.nn.relu(flat @ p["fc1_w"].T + p["fc1_b"])
    logits = h @ p["fc2_w"].T + p["fc2_b"]
    return jax.nn.log_softmax(logits, axis=1)


if __name__ == "__main__":
    key = jax.random.PRNGKey(0)
    k_x, k_p = jax.random.split(key)
    # 20*5*5 fc1 input implies 1x28x28 images (MNIST-shaped); batch = 2.
    x = jax.random.normal(k_x, (2, 1, 28, 28), jnp.float32)
    params = init_params(k_p)
    prep = prepare_params(params)          # one-time packing, outside the hot path

    fwd = jax.jit(convnet_forward)
    out = jax.block_until_ready(fwd(x, prep))

    ref = ref_forward(x, params)
    assert out.shape == (2, 10) and out.dtype == jnp.float32
    # bf16 MXU operands (f32 accumulation) vs f32 reference: a 5e-2 tolerance
    # over 4 stacked bf16 contractions + two BN rescalings.
    err = float(jnp.max(jnp.abs(out - ref)))
    assert jnp.allclose(out, ref, rtol=5e-2, atol=5e-2), err

    print("KERNEL_OK")
</pallas_src>

<mosaic_0001>
module attributes {stable_mosaic.version = 11 : i64} {
  func.func @_conv_bn_relu_pool_kernel(%arg0: i32, %arg1: memref<576x25xbf16, #tpu.memory_space<vmem>>, %arg2: memref<25x128xbf16, #tpu.memory_space<vmem>>, %arg3: memref<1x128xf32, #tpu.memory_space<vmem>>, %arg4: memref<144x128xbf16, #tpu.memory_space<vmem>>) attributes {dimension_semantics = [#tpu.dimension_semantics<parallel>], iteration_bounds = array<i64: 2>, scalar_prefetch = 0 : i64, scratch_operands = 0 : i64, tpu.core_type = #tpu.core_type<tc>, window_params = [{transform_indices = @transform_0, window_bounds = array<i64: 576, 25>}, {pipeline_mode = #tpu.pipeline_mode<synchronous>, transform_indices = @transform_1, window_bounds = array<i64: 25, 128>}, {pipeline_mode = #tpu.pipeline_mode<synchronous>, transform_indices = @transform_2, window_bounds = array<i64: 1, 128>}, {transform_indices = @transform_3, window_bounds = array<i64: 144, 128>}]} {
    %c0 = arith.constant 0 : index
    %c0_0 = arith.constant 0 : index
    %0 = vector.load %arg1[%c0, %c0_0] : memref<576x25xbf16, #tpu.memory_space<vmem>>, vector<576x25xbf16>
    %c0_1 = arith.constant 0 : index
    %c0_2 = arith.constant 0 : index
    %1 = vector.load %arg2[%c0_1, %c0_2] : memref<25x128xbf16, #tpu.memory_space<vmem>>, vector<25x128xbf16>
    %cst = arith.constant dense<0.000000e+00> : vector<576x128xf32>
    %2 = tpu.matmul %0, %1, %cst {dimension_numbers = #tpu.dot_dimension_numbers<[1], [0], [0], [1], [0, 0, 1, 1], [], []>} : vector<576x25xbf16>, vector<25x128xbf16>, vector<576x128xf32> -> vector<576x128xf32>
    %3 = vector.extract_strided_slice %2 {offsets = [0, 0], sizes = [144, 128], strides = [1, 1]} : vector<576x128xf32> to vector<144x128xf32>
    %4 = vector.extract_strided_slice %2 {offsets = [144, 0], sizes = [144, 128], strides = [1, 1]} : vector<576x128xf32> to vector<144x128xf32>
    %5 = arith.maximumf %3, %4 : vector<144x128xf32>
    %6 = vector.extract_strided_slice %2 {offsets = [288, 0], sizes = [144, 128], strides = [1, 1]} : vector<576x128xf32> to vector<144x128xf32>
    %7 = vector.extract_strided_slice %2 {offsets = [432, 0], sizes = [144, 128], strides = [1, 1]} : vector<576x128xf32> to vector<144x128xf32>
    %8 = arith.maximumf %6, %7 : vector<144x128xf32>
    %9 = arith.maximumf %5, %8 : vector<144x128xf32>
    %c0_3 = arith.constant 0 : index
    %c0_4 = arith.constant 0 : index
    %10 = vector.load %arg3[%c0_3, %c0_4] : memref<1x128xf32, #tpu.memory_space<vmem>>, vector<1x128xf32>
    %11 = vector.broadcast %10 : vector<1x128xf32> to vector<144x128xf32>
    %12 = arith.addf %9, %11 : vector<144x128xf32>
    %cst_5 = arith.constant 0.000000e+00 : f32
    %13 = vector.broadcast %cst_5 : f32 to vector<144x128xf32>
    %14 = arith.maximumf %12, %13 : vector<144x128xf32>
    %15 = arith.truncf %14 : vector<144x128xf32> to vector<144x128xbf16>
    %c0_6 = arith.constant 0 : index
    %c0_7 = arith.constant 0 : index
    %16 = vector.load %arg4[%c0_6, %c0_7] : memref<144x128xbf16, #tpu.memory_space<vmem>>, vector<144x128xbf16>
    tpu.vector_store %arg4[%c0_6, %c0_7], %15 {strides = array<i32>} : memref<144x128xbf16, #tpu.memory_space<vmem>>, vector<144x128xbf16>,
    return
  }
  func.func @transform_0(%arg0: i32) -> (i32, i32) {
    %c0_i32 = arith.constant 0 : i32
    %c0_i32_0 = arith.constant 0 : i32
    return %arg0, %c0_i32 : i32, i32
  }
  func.func @transform_1(%arg0: i32) -> (i32, i32) {
    %c0_i32 = arith.constant 0 : i32
    %c0_i32_0 = arith.constant 0 : i32
    %c0_i32_1 = arith.constant 0 : i32
    return %c0_i32, %c0_i32_0 : i32, i32
  }
  func.func @transform_2(%arg0: i32) -> (i32, i32) {
    %c0_i32 = arith.constant 0 : i32
    %c0_i32_0 = arith.constant 0 : i32
    %c0_i32_1 = arith.constant 0 : i32
    return %c0_i32, %c0_i32_0 : i32, i32
  }
  func.func @transform_3(%arg0: i32) -> (i32, i32) {
    %c0_i32 = arith.constant 0 : i32
    %c0_i32_0 = arith.constant 0 : i32
    return %arg0, %c0_i32 : i32, i32
  }
}

module attributes {stable_mosaic.version = 11 : i64} {
  func.func @_conv_bn_relu_pool_kernel(%arg0: i32, %arg1: memref<224x90xbf16, #tpu.memory_space<vmem>>, %arg2: memref<90x128xbf16, #tpu.memory_space<vmem>>, %arg3: memref<1x128xf32, #tpu.memory_space<vmem>>, %arg4: memref<56x128xbf16, #tpu.memory_space<vmem>>) attributes {dimension_semantics = [#tpu.dimension_semantics<parallel>], iteration_bounds = array<i64: 1>, scalar_prefetch = 0 : i64, scratch_operands = 0 : i64, tpu.core_type = #tpu.core_type<tc>, window_params = [{transform_indices = @transform_0, window_bounds = array<i64: 224, 90>}, {pipeline_mode = #tpu.pipeline_mode<synchronous>, transform_indices = @transform_1, window_bounds = array<i64: 90, 128>}, {pipeline_mode = #tpu.pipeline_mode<synchronous>, transform_indices = @transform_2, window_bounds = array<i64: 1, 128>}, {transform_indices = @transform_3, window_bounds = array<i64: 56, 128>}]} {
    %c0 = arith.constant 0 : index
    %c0_0 = arith.constant 0 : index
    %0 = vector.load %arg1[%c0, %c0_0] : memref<224x90xbf16, #tpu.memory_space<vmem>>, vector<224x90xbf16>
    %c0_1 = arith.constant 0 : index
    %c0_2 = arith.constant 0 : index
    %1 = vector.load %arg2[%c0_1, %c0_2] : memref<90x128xbf16, #tpu.memory_space<vmem>>, vector<90x128xbf16>
    %cst = arith.constant dense<0.000000e+00> : vector<224x128xf32>
    %2 = tpu.matmul %0, %1, %cst {dimension_numbers = #tpu.dot_dimension_numbers<[1], [0], [0], [1], [0, 0, 1, 1], [], []>} : vector<224x90xbf16>, vector<90x128xbf16>, vector<224x128xf32> -> vector<224x128xf32>
    %3 = vector.extract_strided_slice %2 {offsets = [0, 0], sizes = [56, 128], strides = [1, 1]} : vector<224x128xf32> to vector<56x128xf32>
    %4 = vector.extract_strided_slice %2 {offsets = [56, 0], sizes = [56, 128], strides = [1, 1]} : vector<224x128xf32> to vector<56x128xf32>
    %5 = arith.maximumf %3, %4 : vector<56x128xf32>
    %6 = vector.extract_strided_slice %2 {offsets = [112, 0], sizes = [56, 128], strides = [1, 1]} : vector<224x128xf32> to vector<56x128xf32>
    %7 = vector.extract_strided_slice %2 {offsets = [168, 0], sizes = [56, 128], strides = [1, 1]} : vector<224x128xf32> to vector<56x128xf32>
    %8 = arith.maximumf %6, %7 : vector<56x128xf32>
    %9 = arith.maximumf %5, %8 : vector<56x128xf32>
    %c0_3 = arith.constant 0 : index
    %c0_4 = arith.constant 0 : index
    %10 = vector.load %arg3[%c0_3, %c0_4] : memref<1x128xf32, #tpu.memory_space<vmem>>, vector<1x128xf32>
    %11 = vector.broadcast %10 : vector<1x128xf32> to vector<56x128xf32>
    %12 = arith.addf %9, %11 : vector<56x128xf32>
    %cst_5 = arith.constant 0.000000e+00 : f32
    %13 = vector.broadcast %cst_5 : f32 to vector<56x128xf32>
    %14 = arith.maximumf %12, %13 : vector<56x128xf32>
    %15 = arith.truncf %14 : vector<56x128xf32> to vector<56x128xbf16>
    %c0_6 = arith.constant 0 : index
    %c0_7 = arith.constant 0 : index
    %16 = vector.load %arg4[%c0_6, %c0_7] : memref<56x128xbf16, #tpu.memory_space<vmem>>, vector<56x128xbf16>
    tpu.vector_store %arg4[%c0_6, %c0_7], %15 {strides = array<i32>} : memref<56x128xbf16, #tpu.memory_space<vmem>>, vector<56x128xbf16>,
    return
  }
  func.func @transform_0(%arg0: i32) -> (i32, i32) {
    %c0_i32 = arith.constant 0 : i32
    %c0_i32_0 = arith.constant 0 : i32
    return %arg0, %c0_i32 : i32, i32
  }
  func.func @transform_1(%arg0: i32) -> (i32, i32) {
    %c0_i32 = arith.constant 0 : i32
    %c0_i32_0 = arith.constant 0 : i32
    %c0_i32_1 = arith.constant 0 : i32
    return %c0_i32, %c0_i32_0 : i32, i32
  }
  func.func @transform_2(%arg0: i32) -> (i32, i32) {
    %c0_i32 = arith.constant 0 : i32
    %c0_i32_0 = arith.constant 0 : i32
    %c0_i32_1 = arith.constant 0 : i32
    return %c0_i32, %c0_i32_0 : i32, i32
  }
  func.func @transform_3(%arg0: i32) -> (i32, i32) {
    %c0_i32 = arith.constant 0 : i32
    %c0_i32_0 = arith.constant 0 : i32
    return %arg0, %c0_i32 : i32, i32
  }
}

module attributes {stable_mosaic.version = 11 : i64} {
  func.func @_fc_head_kernel(%arg0: i32, %arg1: memref<2x128xbf16, #tpu.memory_space<vmem>>, %arg2: memref<128x512xbf16, #tpu.memory_space<vmem>>, %arg3: memref<1x512xf32, #tpu.memory_space<vmem>>, %arg4: memref<512x128xbf16, #tpu.memory_space<vmem>>, %arg5: memref<1x128xf32, #tpu.memory_space<vmem>>, %arg6: memref<2x128xf32, #tpu.memory_space<vmem>>, %arg7: memref<2x512xf32, #tpu.memory_space<vmem>>) attributes {dimension_semantics = [#tpu.dimension_semantics<arbitrary>], iteration_bounds = array<i64: 4>, scalar_prefetch = 0 : i64, scratch_operands = 1 : i64, tpu.core_type = #tpu.core_type<tc>, window_params = [{transform_indices = @transform_0, window_bounds = array<i64: 2, 128>}, {transform_indices = @transform_1, window_bounds = array<i64: 128, 512>}, {pipeline_mode = #tpu.pipeline_mode<synchronous>, transform_indices = @transform_2, window_bounds = array<i64: 1, 512>}, {pipeline_mode = #tpu.pipeline_mode<synchronous>, transform_indices = @transform_3, window_bounds = array<i64: 512, 128>}, {pipeline_mode = #tpu.pipeline_mode<synchronous>, transform_indices = @transform_4, window_bounds = array<i64: 1, 128>}, {pipeline_mode = #tpu.pipeline_mode<synchronous>, transform_indices = @transform_5, window_bounds = array<i64: 2, 128>}]} {
    %c0_i32 = arith.constant 0 : i32
    %0 = arith.cmpi eq, %arg0, %c0_i32 : i32
    %1 = arith.extui %0 : i1 to i32
    %c0_i32_0 = arith.constant 0 : i32
    %2 = arith.cmpi ne, %1, %c0_i32_0 : i32
    scf.if %2 {
      %cst_9 = arith.constant 0.000000e+00 : f32
      %12 = vector.broadcast %cst_9 : f32 to vector<2x512xf32>
      %c0_10 = arith.constant 0 : index
      %c0_11 = arith.constant 0 : index
      %13 = vector.load %arg7[%c0_10, %c0_11] : memref<2x512xf32, #tpu.memory_space<vmem>>, vector<2x512xf32>
      tpu.vector_store %arg7[%c0_10, %c0_11], %12 {strides = array<i32>} : memref<2x512xf32, #tpu.memory_space<vmem>>, vector<2x512xf32>,
    } else {
    }
    %c0 = arith.constant 0 : index
    %c0_1 = arith.constant 0 : index
    %3 = vector.load %arg7[%c0, %c0_1] : memref<2x512xf32, #tpu.memory_space<vmem>>, vector<2x512xf32>
    %c0_2 = arith.constant 0 : index
    %c0_3 = arith.constant 0 : index
    %4 = vector.load %arg1[%c0_2, %c0_3] : memref<2x128xbf16, #tpu.memory_space<vmem>>, vector<2x128xbf16>
    %c0_4 = arith.constant 0 : index
    %c0_5 = arith.constant 0 : index
    %5 = vector.load %arg2[%c0_4, %c0_5] : memref<128x512xbf16, #tpu.memory_space<vmem>>, vector<128x512xbf16>
    %cst = arith.constant dense<0.000000e+00> : vector<2x512xf32>
    %6 = tpu.matmul %4, %5, %cst {dimension_numbers = #tpu.dot_dimension_numbers<[1], [0], [0], [1], [0, 0, 1, 1], [], []>} : vector<2x128xbf16>, vector<128x512xbf16>, vector<2x512xf32> -> vector<2x512xf32>
    %7 = arith.addf %3, %6 : vector<2x512xf32>
    %c0_6 = arith.constant 0 : index
    %c0_7 = arith.constant 0 : index
    %8 = vector.load %arg7[%c0_6, %c0_7] : memref<2x512xf32, #tpu.memory_space<vmem>>, vector<2x512xf32>
    tpu.vector_store %arg7[%c0_6, %c0_7], %7 {strides = array<i32>} : memref<2x512xf32, #tpu.memory_space<vmem>>, vector<2x512xf32>,
    %c3_i32 = arith.constant 3 : i32
    %9 = arith.cmpi eq, %arg0, %c3_i32 : i32
    %10 = arith.extui %9 : i1 to i32
    %c0_i32_8 = arith.constant 0 : i32
    %11 = arith.cmpi ne, %10, %c0_i32_8 : i32
    scf.if %11 {
      %c0_9 = arith.constant 0 : index
      %c0_10 = arith.constant 0 : index
      %12 = vector.load %arg7[%c0_9, %c0_10] : memref<2x512xf32, #tpu.memory_space<vmem>>, vector<2x512xf32>
      %c0_11 = arith.constant 0 : index
      %c0_12 = arith.constant 0 : index
      %13 = vector.load %arg3[%c0_11, %c0_12] : memref<1x512xf32, #tpu.memory_space<vmem>>, vector<1x512xf32>
      %14 = vector.broadcast %13 : vector<1x512xf32> to vector<2x512xf32>
      %15 = arith.addf %12, %14 : vector<2x512xf32>
      %cst_13 = arith.constant 0.000000e+00 : f32
      %16 = vector.broadcast %cst_13 : f32 to vector<2x512xf32>
      %17 = arith.maximumf %15, %16 : vector<2x512xf32>
      %18 = arith.truncf %17 : vector<2x512xf32> to vector<2x512xbf16>
      %c0_14 = arith.constant 0 : index
      %c0_15 = arith.constant 0 : index
      %19 = vector.load %arg4[%c0_14, %c0_15] : memref<512x128xbf16, #tpu.memory_space<vmem>>, vector<512x128xbf16>
      %cst_16 = arith.constant dense<0.000000e+00> : vector<2x128xf32>
      %20 = tpu.matmul %18, %19, %cst_16 {dimension_numbers = #tpu.dot_dimension_numbers<[1], [0], [0], [1], [0, 0, 1, 1], [], []>} : vector<2x512xbf16>, vector<512x128xbf16>, vector<2x128xf32> -> vector<2x128xf32>
      %c0_17 = arith.constant 0 : index
      %c0_18 = arith.constant 0 : index
      %21 = vector.load %arg5[%c0_17, %c0_18] : memref<1x128xf32, #tpu.memory_space<vmem>>, vector<1x128xf32>
      %22 = vector.broadcast %21 : vector<1x128xf32> to vector<2x128xf32>
      %23 = arith.addf %20, %22 : vector<2x128xf32>
      %24 = tpu.iota {dimensions = array<i32: 1>} : vector<2x128xi32>
      %c10_i32 = arith.constant 10 : i32
      %25 = vector.broadcast %c10_i32 : i32 to vector<2x128xi32>
      %26 = arith.cmpi slt, %24, %25 : vector<2x128xi32>
      %cst_19 = arith.constant -1.000000e+30 : f32
      %27 = vector.broadcast %cst_19 : f32 to vector<2x128xf32>
      %28 = arith.select %26, %23, %27 : vector<2x128xi1>, vector<2x128xf32>
      %cst_20 = arith.constant dense<0xFF800000> : vector<2xf32>
      %29 = vector.multi_reduction <maximumf>, %28, %cst_20 [1] : vector<2x128xf32> to vector<2xf32>
      %30 = vector.shape_cast %29 : vector<2xf32> to vector<2x1xf32>
      %31 = vector.broadcast %30 : vector<2x1xf32> to vector<2x128xf32>
      %32 = arith.subf %28, %31 : vector<2x128xf32>
      %33 = math.exp %32 : vector<2x128xf32>
      %cst_21 = arith.constant dense<0.000000e+00> : vector<2xf32>
      %34 = vector.multi_reduction <add>, %33, %cst_21 [1] : vector<2x128xf32> to vector<2xf32>
      %35 = vector.shape_cast %34 : vector<2xf32> to vector<2x1xf32>
      %36 = math.log %35 : vector<2x1xf32>
      %37 = arith.addf %30, %36 : vector<2x1xf32>
      %38 = vector.broadcast %37 : vector<2x1xf32> to vector<2x128xf32>
      %39 = arith.subf %28, %38 : vector<2x128xf32>
      %c0_22 = arith.constant 0 : index
      %c0_23 = arith.constant 0 : index
      %40 = vector.load %arg6[%c0_22, %c0_23] : memref<2x128xf32, #tpu.memory_space<vmem>>, vector<2x128xf32>
      tpu.vector_store %arg6[%c0_22, %c0_23], %39 {strides = array<i32>} : memref<2x128xf32, #tpu.memory_space<vmem>>, vector<2x128xf32>,
    } else {
    }
    return
  }
  func.func @transform_0(%arg0: i32) -> (i32, i32) {
    %c0_i32 = arith.constant 0 : i32
    %c0_i32_0 = arith.constant 0 : i32
    return %c0_i32, %arg0 : i32, i32
  }
  func.func @transform_1(%arg0: i32) -> (i32, i32) {
    %c0_i32 = arith.constant 0 : i32
    %c0_i32_0 = arith.constant 0 : i32
    return %arg0, %c0_i32 : i32, i32
  }
  func.func @transform_2(%arg0: i32) -> (i32, i32) {
    %c0_i32 = arith.constant 0 : i32
    %c0_i32_0 = arith.constant 0 : i32
    %c0_i32_1 = arith.constant 0 : i32
    return %c0_i32, %c0_i32_0 : i32, i32
  }
  func.func @transform_3(%arg0: i32) -> (i32, i32) {
    %c0_i32 = arith.constant 0 : i32
    %c0_i32_0 = arith.constant 0 : i32
    %c0_i32_1 = arith.constant 0 : i32
    return %c0_i32, %c0_i32_0 : i32, i32
  }
  func.func @transform_4(%arg0: i32) -> (i32, i32) {
    %c0_i32 = arith.constant 0 : i32
    %c0_i32_0 = arith.constant 0 : i32
    %c0_i32_1 = arith.constant 0 : i32
    return %c0_i32, %c0_i32_0 : i32, i32
  }
  func.func @transform_5(%arg0: i32) -> (i32, i32) {
    %c0_i32 = arith.constant 0 : i32
    %c0_i32_0 = arith.constant 0 : i32
    %c0_i32_1 = arith.constant 0 : i32
    return %c0_i32, %c0_i32_0 : i32, i32
  }
}

</mosaic_0001>

<llo_original>
// kernel: convnet_forward.3
$region0: #{convnet_forward.3}
  #allocation0 [shape = 'u32[]', space=smem, size = 0x4, offset = 0x4, fixed_abs, tag = 'smem constant byte address 0x4 - core index']
  #allocation1 [shape = 'u32[72,128]{1,0:T(1,128)}', space=vmem, size = 0x9000, scoped, tag = 'internal scratch']
  %s0 = inlined_call_operand.vmem [shape: bf16[1152,25], index: 0, kind: input, shape index: {}]
  %s1 = inlined_call_operand.vmem [shape: bf16[25,128], index: 1, kind: input, shape index: {}]
  %s2 = inlined_call_operand.vmem [shape: f32[1,128], index: 2, kind: input, shape index: {}]
  %s3 = inlined_call_operand.vmem [shape: bf16[288,128], index: 3, kind: output, shape index: {}]
  %s4 = sld [smem:[#allocation0]]
  $region45: #{convnet_forward.3} parent=0
    _
  %s6 = ssub.s32 1, %s4
  %s7 = scalar_select 0, %s6, %s4
  loop: start=0, step=1, limit=4
  $region2: #{convnet_forward.3} parent=0 // loop_pre_header
    _
  $region3: #{convnet_forward.3} parent=0 // loop_header
    %s9 = sphi 0, %s13
    %p10 = scmp.ge.s32.totalorder %s9, 4
    %s19 = sphi 0, %s21
    %s22 = sphi 0, %s19
    %s23 = sphi 0, %s22
    %s39 = sphi 0, %s23
    %s43 = sphi 0, %s43
    %s45 = sphi 0, %s43
    %s46 = sphi 0, %s45
    %s60 = sphi 0, %s46
    %s64 = sphi 0, %s64
    %s66 = sphi 0, %s64
    %s67 = sphi 0, %s66
    %s81 = sphi 0, %s67
    %s87 = sphi 0, %s89
    %s90 = sphi 0, %s87
    %s91 = sphi 0, %s90
    %s107 = sphi 0, %s91
  $region4: #{convnet_forward.3} parent=0 // loop_header_branch
    %12 = sbr.rel (%p10) target = $region8
  $region5: #{convnet_forward.3} parent=0 // loop_body
    %s14 = ssub.s32 %s9, 1
    %s15 = ssub.s32 %s9, 2
    %s16 = sadd.s32 %s9, 1
    %s17 = ssub.s32 %s9, %s16
    %p18 = scmp.eq.s32.totalorder %s17, 0
    %s20 = sadd.s32 %s19, 1
    %s21 = scalar_select %p18, %s19, %s20
    %p24 = pneg %p18
    %p25 = scmp.eq.s32.totalorder %s9, 1
    %p26 = por %p24, %p25
    %p27 = scmp.ne.s32.totalorder %s19, %s22
    %p28 = scmp.eq.s32.totalorder %s9, 0
    %p29 = por %p27, %p28
    %p30 = scmp.ne.s32.totalorder %s19, %s22
    %p31 = scmp.eq.s32.totalorder %s14, 1
    %p32 = por %p30, %p31
    %p33 = scmp.ne.s32.totalorder %s22, %s23
    %p34 = scmp.eq.s32.totalorder %s14, 0
    %p35 = por %p33, %p34
    %p36 = scmp.ne.s32.totalorder %s22, %s23
    %p37 = scmp.eq.s32.totalorder %s15, 1
    %p38 = por %p36, %p37
    %p40 = scmp.ne.s32.totalorder %s23, %s39
    %p41 = scmp.eq.s32.totalorder %s15, 0
    %p42 = por %p40, %p41
    %s44 = sadd.s32 %s43, 1
    %p47 = scmp.eq.s32.totalorder %s9, 1
    %p48 = scmp.ne.s32.totalorder %s43, %s45
    %p49 = scmp.eq.s32.totalorder %s9, 0
    %p50 = por %p48, %p49
    %p51 = scmp.ne.s32.totalorder %s43, %s45
    %p52 = scmp.eq.s32.totalorder %s14, 1
    %p53 = por %p51, %p52
    %p54 = scmp.ne.s32.totalorder %s45, %s46
    %p55 = scmp.eq.s32.totalorder %s14, 0
    %p56 = por %p54, %p55
    %p57 = scmp.ne.s32.totalorder %s45, %s46
    %p58 = scmp.eq.s32.totalorder %s15, 1
    %p59 = por %p57, %p58
    %p61 = scmp.ne.s32.totalorder %s46, %s60
    %p62 = scmp.eq.s32.totalorder %s15, 0
    %p63 = por %p61, %p62
    %s65 = sadd.s32 %s64, 1
    %p68 = scmp.eq.s32.totalorder %s9, 1
    %p69 = scmp.ne.s32.totalorder %s64, %s66
    %p70 = scmp.eq.s32.totalorder %s9, 0
    %p71 = por %p69, %p70
    %p72 = scmp.ne.s32.totalorder %s64, %s66
    %p73 = scmp.eq.s32.totalorder %s14, 1
    %p74 = por %p72, %p73
    %p75 = scmp.ne.s32.totalorder %s66, %s67
    %p76 = scmp.eq.s32.totalorder %s14, 0
    %p77 = por %p75, %p76
    %p78 = scmp.ne.s32.totalorder %s66, %s67
    %p79 = scmp.eq.s32.totalorder %s15, 1
    %p80 = por %p78, %p79
    %p82 = scmp.ne.s32.totalorder %s67, %s81
    %p83 = scmp.eq.s32.totalorder %s15, 0
    %p84 = por %p82, %p83
    %s85 = ssub.s32 %s9, %s16
    %p86 = scmp.eq.s32.totalorder %s85, 0
    %s88 = sadd.s32 %s87, 1
    %s89 = scalar_select %p86, %s87, %s88
    %p92 = pneg %p86
    %p93 = scmp.eq.s32.totalorder %s9, 1
    %p94 = por %p92, %p93
    %p95 = scmp.ne.s32.totalorder %s87, %s90
    %p96 = scmp.eq.s32.totalorder %s9, 0
    %p97 = por %p95, %p96
    %p98 = scmp.ne.s32.totalorder %s87, %s90
    %p99 = scmp.eq.s32.totalorder %s14, 1
    %p100 = por %p98, %p99
    %p101 = scmp.ne.s32.totalorder %s90, %s91
    %p102 = scmp.eq.s32.totalorder %s14, 0
    %p103 = por %p101, %p102
    %p104 = scmp.ne.s32.totalorder %s90, %s91
    %p105 = scmp.eq.s32.totalorder %s15, 1
    %p106 = por %p104, %p105
    %p108 = scmp.ne.s32.totalorder %s91, %s107
    %p109 = scmp.eq.s32.totalorder %s15, 0
    %p110 = por %p108, %p109
    %p111 = scmp.le.s32.totalorder 1, %s9
    %p112 = scmp.lt.s32.totalorder %s9, 3
    %p113 = pnand %p111, %p112
    %p114 = pneg %p113
    // Predicated region
    $region9: #{convnet_forward.3} parent=5 // pred_check
      _
    $region10: #{convnet_forward.3} parent=5 // pred_check_branch
      %116 = sbr.rel (%p113) target = $region12
    $region11: #{convnet_forward.3} parent=5 // pred_region
      %s117 = ssub.s32 %s9, 1
      // Predicated region
      $region13: #{convnet_forward.3} parent=11 // pred_check
        %p118 = pneg %p56
      $region14: #{convnet_forward.3} parent=11 // pred_check_branch
        %120 = sbr.rel (%p118) target = $region16
      $region15: #{convnet_forward.3} parent=11 // pred_region
        _
      $region16: #{convnet_forward.3} parent=11 // pred_fallthru
        _
      // Predicated region
      $region17: #{convnet_forward.3} parent=11 // pred_check
        %p121 = pneg %p77
      $region18: #{convnet_forward.3} parent=11 // pred_check_branch
        %123 = sbr.rel (%p121) target = $region20
      $region19: #{convnet_forward.3} parent=11 // pred_region
        _
      $region20: #{convnet_forward.3} parent=11 // pred_fallthru
        _
    $region12: #{convnet_forward.3} parent=5 // pred_fallthru
      _
    %p124 = scmp.lt.s32.totalorder %s9, 2
    // Predicated region
    $region21: #{convnet_forward.3} parent=5 // pred_check
      %p125 = pneg %p124
    $region22: #{convnet_forward.3} parent=5 // pred_check_branch
      %127 = sbr.rel (%p125) target = $region24
    $region23: #{convnet_forward.3} parent=5 // pred_region
      // Predicated region
      $region25: #{convnet_forward.3} parent=23 // pred_check
        %p128 = pneg %p29
      $region26: #{convnet_forward.3} parent=23 // pred_check_branch
        %130 = sbr.rel (%p128) target = $region28
      $region27: #{convnet_forward.3} parent=23 // pred_region
        %s131 = smul.u32 72, %s9
        %p132 = scmp.lt.s32.totalorder %s131, 143
        %s133 = scalar_select %p132, %s131, 143
        %s134 = smul.addr %s133, 4
        %s135 = scalar_lea.vmem %s0, %s134
        %s136 = smul.u32 72, %s9
      $region28: #{convnet_forward.3} parent=23 // pred_fallthru
        _
    $region24: #{convnet_forward.3} parent=5 // pred_fallthru
      _
    %p137 = scmp.le.s32.totalorder 1, %s9
    %p138 = scmp.lt.s32.totalorder %s9, 3
    %p139 = pnand %p137, %p138
    %p140 = pneg %p139
    // Predicated region
    $region29: #{convnet_forward.3} parent=5 // pred_check
      _
    $region30: #{convnet_forward.3} parent=5 // pred_check_branch
      %142 = sbr.rel (%p139) target = $region32
    $region31: #{convnet_forward.3} parent=5 // pred_region
      %s143 = ssub.s32 %s9, 1
      %s144 = smul.u32 72, %s14
      %p145 = scmp.lt.s32.totalorder %s144, 143
      %s146 = scalar_select %p145, %s144, 143
      %s147 = smul.addr %s146, 4
      %s148 = scalar_lea.vmem %s0, %s147
      %p149 = pneg %p35
      %p150 = pneg %p32
      %p151 = pneg %p56
      %p152 = pneg %p53
      %p153 = pneg %p77
      %p154 = pneg %p74
      %p155 = pneg %p103
      %p156 = pneg %p100
      %s157 = smul.u32 18, %s14
      %p158 = scmp.lt.s32.totalorder %s157, 35
      %s159 = scalar_select %p158, %s157, 35
      %s160 = smul.addr %s159, 4
      %s161 = scalar_lea.vmem %s3, %s160
      %s162 = smul.u32 72, %s14
      %p163 = scmp.lt.s32.totalorder %s162, 143
      %s164 = scalar_select %p163, %s162, 143
      %s165 = smul.addr %s164, 4
      %s166 = scalar_lea.vmem %s0, %s165
      %s167 = smul.u32 72, %s14
      %s168 = smul.u32 18, %s14
      %p169 = scmp.lt.s32.totalorder %s168, 35
      %s170 = scalar_select %p169, %s168, 35
      %s171 = smul.addr %s170, 4
      %s172 = scalar_lea.vmem %s3, %s171
      %s173 = smul.u32 18, %s14
      %v175 = vld [vmem:[%s166] sm:$0xf]
      %v176 = vld [vmem:[%s166 + $0x4] sm:$0xf]
      %v177 = vld [vmem:[%s166 + $0x8] sm:$0xf]
      %v178 = vld [vmem:[%s166 + $0xc] sm:$0xf]
      %v179 = vld [vmem:[%s166 + $0x10] sm:$0xf]
      %v180 = vld [vmem:[%s166 + $0x14] sm:$0xf]
      %v181 = vld [vmem:[%s166 + $0x18] sm:$0xf]
      %v182 = vld [vmem:[%s166 + $0x1c] sm:$0xf]
      %v183 = vld [vmem:[%s166 + $0x20] sm:$0xf]
      %v184 = vld [vmem:[%s166 + $0x24] sm:$0xf]
      %v185 = vld [vmem:[%s166 + $0x28] sm:$0xf]
      %v186 = vld [vmem:[%s166 + $0x2c] sm:$0xf]
      %v187 = vld [vmem:[%s166 + $0x30] sm:$0xf]
      %v188 = vld [vmem:[%s166 + $0x34] sm:$0xf]
      %v189 = vld [vmem:[%s166 + $0x38] sm:$0xf]
      %v190 = vld [vmem:[%s166 + $0x3c] sm:$0xf]
      %v191 = vld [vmem:[%s166 + $0x40] sm:$0xf]
      %v192 = vld [vmem:[%s166 + $0x44] sm:$0xf]
      %v193 = vld [vmem:[%s166 + $0x48] sm:$0xf]
      %v194 = vld [vmem:[%s166 + $0x4c] sm:$0xf]
      %v195 = vld [vmem:[%s166 + $0x50] sm:$0xf]
      %v196 = vld [vmem:[%s166 + $0x54] sm:$0xf]
      %v197 = vld [vmem:[%s166 + $0x58] sm:$0xf]
      %v198 = vld [vmem:[%s166 + $0x5c] sm:$0xf]
      %v199 = vld [vmem:[%s166 + $0x60] sm:$0xf]
      %v200 = vld [vmem:[%s166 + $0x64] sm:$0xf]
      %v201 = vld [vmem:[%s166 + $0x68] sm:$0xf]
      %v202 = vld [vmem:[%s166 + $0x6c] sm:$0xf]
      %v203 = vld [vmem:[%s166 + $0x70] sm:$0xf]
      %v204 = vld [vmem:[%s166 + $0x74] sm:$0xf]
      %v205 = vld [vmem:[%s166 + $0x78] sm:$0xf]
      %v206 = vld [vmem:[%s166 + $0x7c] sm:$0xf]
      %v207 = vld [vmem:[%s166 + $0x80] sm:$0xf]
      %v208 = vld [vmem:[%s166 + $0x84] sm:$0xf]
      %v209 = vld [vmem:[%s166 + $0x88] sm:$0xf]
      %v210 = vld [vmem:[%s166 + $0x8c] sm:$0xf]
      %v211 = vld [vmem:[%s166 + $0x90] sm:$0xf]
      %v212 = vld [vmem:[%s166 + $0x94] sm:$0xf]
      %v213 = vld [vmem:[%s166 + $0x98] sm:$0xf]
      %v214 = vld [vmem:[%s166 + $0x9c] sm:$0xf]
      %v215 = vld [vmem:[%s166 + $0xa0] sm:$0xf]
      %v216 = vld [vmem:[%s166 + $0xa4] sm:$0xf]
      %v217 = vld [vmem:[%s166 + $0xa8] sm:$0xf]
      %v218 = vld [vmem:[%s166 + $0xac] sm:$0xf]
      %v219 = vld [vmem:[%s166 + $0xb0] sm:$0xf]
      %v220 = vld [vmem:[%s166 + $0xb4] sm:$0xf]
      %v221 = vld [vmem:[%s166 + $0xb8] sm:$0xf]
      %v222 = vld [vmem:[%s166 + $0xbc] sm:$0xf]
      %v223 = vld [vmem:[%s166 + $0xc0] sm:$0xf]
      %v224 = vld [vmem:[%s166 + $0xc4] sm:$0xf]
      %v225 = vld [vmem:[%s166 + $0xc8] sm:$0xf]
      %v226 = vld [vmem:[%s166 + $0xcc] sm:$0xf]
      %v227 = vld [vmem:[%s166 + $0xd0] sm:$0xf]
      %v228 = vld [vmem:[%s166 + $0xd4] sm:$0xf]
      %v229 = vld [vmem:[%s166 + $0xd8] sm:$0xf]
      %v230 = vld [vmem:[%s166 + $0xdc] sm:$0xf]
      %v231 = vld [vmem:[%s166 + $0xe0] sm:$0xf]
      %v232 = vld [vmem:[%s166 + $0xe4] sm:$0xf]
      %v233 = vld [vmem:[%s166 + $0xe8] sm:$0xf]
      %v234 = vld [vmem:[%s166 + $0xec] sm:$0xf]
      %v235 = vld [vmem:[%s166 + $0xf0] sm:$0xf]
      %v236 = vld [vmem:[%s166 + $0xf4] sm:$0xf]
      %v237 = vld [vmem:[%s166 + $0xf8] sm:$0xf]
      %v238 = vld [vmem:[%s166 + $0xfc] sm:$0xf]
      %v239 = vld [vmem:[%s166 + $0x100] sm:$0xf]
      %v240 = vld [vmem:[%s166 + $0x104] sm:$0xf]
      %v241 = vld [vmem:[%s166 + $0x108] sm:$0xf]
      %v242 = vld [vmem:[%s166 + $0x10c] sm:$0xf]
      %v243 = vld [vmem:[%s166 + $0x110] sm:$0xf]
      %v244 = vld [vmem:[%s166 + $0x114] sm:$0xf]
      %v245 = vld [vmem:[%s166 + $0x118] sm:$0xf]
      %v246 = vld [vmem:[%s166 + $0x11c] sm:$0xf]
      %v247 = vld [vmem:[%s1] sm:$0xf]
      %v248 = vld [vmem:[%s1 + $0x4] sm:$0xf]
      %v249 = vld [vmem:[%s1 + $0x8] sm:$0xf]
      %v250 = vld [vmem:[%s1 + $0xc] sm:$0x1]
      %v323 = vunpack.c.l.b16 %v175
      %v324 = vunpack.c.l.b16 %v176
      %v325 = vunpack.c.l.b16 %v177
      %v326 = vunpack.c.l.b16 %v178
      %v327 = vunpack.c.l.b16 %v179
      %v328 = vunpack.c.l.b16 %v180
      %v329 = vunpack.c.l.b16 %v181
      %v330 = vunpack.c.l.b16 %v182
      %v331 = vunpack.c.l.b16 %v183
      %v332 = vunpack.c.l.b16 %v184
      %v333 = vunpack.c.l.b16 %v185
      %v334 = vunpack.c.l.b16 %v186
      %v335 = vunpack.c.l.b16 %v187
      %v336 = vunpack.c.l.b16 %v188
      %v337 = vunpack.c.l.b16 %v189
      %v338 = vunpack.c.l.b16 %v190
      %v339 = vunpack.c.l.b16 %v191
      %v340 = vunpack.c.l.b16 %v192
      %v341 = vunpack.c.l.b16 %v193
      %v342 = vunpack.c.l.b16 %v194
      %v343 = vunpack.c.l.b16 %v195
      %v344 = vunpack.c.l.b16 %v196
      %v345 = vunpack.c.l.b16 %v197
      %v346 = vunpack.c.l.b16 %v198
      %v347 = vunpack.c.l.b16 %v199
      %v348 = vunpack.c.l.b16 %v200
      %v349 = vunpack.c.l.b16 %v201
      %v350 = vunpack.c.l.b16 %v202
      %v351 = vunpack.c.l.b16 %v203
      %v352 = vunpack.c.l.b16 %v204
      %v353 = vunpack.c.l.b16 %v205
      %v354 = vunpack.c.l.b16 %v206
      %v355 = vunpack.c.l.b16 %v207
      %v356 = vunpack.c.l.b16 %v208
      %v357 = vunpack.c.l.b16 %v209
      %v358 = vunpack.c.l.b16 %v210
      %v359 = vunpack.c.l.b16 %v211
      %v360 = vunpack.c.l.b16 %v212
      %v361 = vunpack.c.l.b16 %v213
      %v362 = vunpack.c.l.b16 %v214
      %v363 = vunpack.c.l.b16 %v215
      %v364 = vunpack.c.l.b16 %v216
      %v365 = vunpack.c.l.b16 %v217
      %v366 = vunpack.c.l.b16 %v218
      %v367 = vunpack.c.l.b16 %v219
      %v368 = vunpack.c.l.b16 %v220
      %v369 = vunpack.c.l.b16 %v221
      %v370 = vunpack.c.l.b16 %v222
      %v371 = vunpack.c.l.b16 %v223
      %v372 = vunpack.c.l.b16 %v224
      %v373 = vunpack.c.l.b16 %v225
      %v374 = vunpack.c.l.b16 %v226
      %v375 = vunpack.c.l.b16 %v227
      %v376 = vunpack.c.l.b16 %v228
      %v377 = vunpack.c.l.b16 %v229
      %v378 = vunpack.c.l.b16 %v230
      %v379 = vunpack.c.l.b16 %v231
      %v380 = vunpack.c.l.b16 %v232
      %v381 = vunpack.c.l.b16 %v233
      %v382 = vunpack.c.l.b16 %v234
      %v383 = vunpack.c.l.b16 %v235
      %v384 = vunpack.c.l.b16 %v236
      %v385 = vunpack.c.l.b16 %v237
      %v386 = vunpack.c.l.b16 %v238
      %v387 = vunpack.c.l.b16 %v239
      %v388 = vunpack.c.l.b16 %v240
      %v389 = vunpack.c.l.b16 %v241
      %v390 = vunpack.c.l.b16 %v242
      %v391 = vunpack.c.l.b16 %v243
      %v392 = vunpack.c.l.b16 %v244
      %v393 = vunpack.c.l.b16 %v245
      %v394 = vunpack.c.l.b16 %v246
      %v395 = vpack.c.b16 %v324, %v323
      %v396 = vpack.c.b16 %v326, %v325
      %v397 = vpack.c.b16 %v328, %v327
      %v398 = vpack.c.b16 %v330, %v329
      %v399 = vpack.c.b16 %v332, %v331
      %v400 = vpack.c.b16 %v334, %v333
      %v401 = vpack.c.b16 %v336, %v335
      %v402 = vpack.c.b16 %v338, %v337
      %v403 = vpack.c.b16 %v340, %v339
      %v404 = vpack.c.b16 %v342, %v341
      %v405 = vpack.c.b16 %v344, %v343
      %v406 = vpack.c.b16 %v346, %v345
      %v407 = vpack.c.b16 %v348, %v347
      %v408 = vpack.c.b16 %v350, %v349
      %v409 = vpack.c.b16 %v352, %v351
      %v410 = vpack.c.b16 %v354, %v353
      %v411 = vpack.c.b16 %v356, %v355
      %v412 = vpack.c.b16 %v358, %v357
      %v413 = vpack.c.b16 %v360, %v359
      %v414 = vpack.c.b16 %v362, %v361
      %v415 = vpack.c.b16 %v364, %v363
      %v416 = vpack.c.b16 %v366, %v365
      %v417 = vpack.c.b16 %v368, %v367
      %v418 = vpack.c.b16 %v370, %v369
      %v419 = vpack.c.b16 %v372, %v371
      %v420 = vpack.c.b16 %v374, %v373
      %v421 = vpack.c.b16 %v376, %v375
      %v422 = vpack.c.b16 %v378, %v377
      %v423 = vpack.c.b16 %v380, %v379
      %v424 = vpack.c.b16 %v382, %v381
      %v425 = vpack.c.b16 %v384, %v383
      %v426 = vpack.c.b16 %v386, %v385
      %v427 = vpack.c.b16 %v388, %v387
      %v428 = vpack.c.b16 %v390, %v389
      %v429 = vpack.c.b16 %v392, %v391
      %v430 = vpack.c.b16 %v394, %v393
      %v435 = vunpack.c.l.b16 %v247
      %v436 = vunpack.c.l.b16 %v248
      %v437 = vunpack.c.l.b16 %v249
      %v438 = vunpack.c.l.b16 %v250
      %v439 = vpack.c.b16 %v436, %v435
      %v440 = vpack.c.b16 %v438, %v437
      %vm442 = vcmask 203776
      %v444 = vsel %vm442, %v395, 0
      %v447 = vsel %vm442, %v396, 0
      %v450 = vsel %vm442, %v397, 0
      %v453 = vsel %vm442, %v398, 0
      %v456 = vsel %vm442, %v399, 0
      %v459 = vsel %vm442, %v400, 0
      %v462 = vsel %vm442, %v401, 0
      %v465 = vsel %vm442, %v402, 0
      %v468 = vsel %vm442, %v403, 0
      %v471 = vsel %vm442, %v404, 0
      %v474 = vsel %vm442, %v405, 0
      %v477 = vsel %vm442, %v406, 0
      %v480 = vsel %vm442, %v407, 0
      %v483 = vsel %vm442, %v408, 0
      %v486 = vsel %vm442, %v409, 0
      %v489 = vsel %vm442, %v410, 0
      %v492 = vsel %vm442, %v411, 0
      %v495 = vsel %vm442, %v412, 0
      %v498 = vsel %vm442, %v413, 0
      %v501 = vsel %vm442, %v414, 0
      %v504 = vsel %vm442, %v415, 0
      %v507 = vsel %vm442, %v416, 0
      %v510 = vsel %vm442, %v417, 0
      %v513 = vsel %vm442, %v418, 0
      %v516 = vsel %vm442, %v419, 0
      %v519 = vsel %vm442, %v420, 0
      %v522 = vsel %vm442, %v421, 0
      %v525 = vsel %vm442, %v422, 0
      %v528 = vsel %vm442, %v423, 0
      %v531 = vsel %vm442, %v424, 0
      %v534 = vsel %vm442, %v425, 0
      %v537 = vsel %vm442, %v426, 0
      %v540 = vsel %vm442, %v427, 0
      %v543 = vsel %vm442, %v428, 0
      %v546 = vsel %vm442, %v429, 0
      %v549 = vsel %vm442, %v430, 0
      %vm551 = vcmask 1043456
      %vm552 = vcmask 1044480
      %v553 = vsel %vm551, 4294967295, 65535
      %v554 = vsel %vm552, %v553, 0
      %v556 = vand.u32 %v440, %v554
      %558 = vmatpush.bf16.msra.mxu0 0
      %559 = vmatpush.bf16.msra.mxu0 0
      %560 = vmatpush.bf16.msra.mxu0 0
      %561 = vmatpush.bf16.msra.mxu0 0
      %562 = vmatpush.bf16.msra.mxu0 0
      %563 = vmatpush.bf16.msra.mxu0 0
      %564 = vmatpush.bf16.msra.mxu0 %v556
      %565 = vmatpush.bf16.msra.mxu0 %v439
      %566 = vmatmul.bf16.gmra.mxu0 %v444
      %v567 = vpop.f32.mrf.mxu0
      %v568 = vadd.f32 0.0, %v567
      %v569 = vpop.f32.mrf.mxu0
      %v570 = vadd.f32 0.0, %v569
      %571 = vmatmul.bf16.gmra.mxu0 %v447
      %v572 = vpop.f32.mrf.mxu0
      %v573 = vadd.f32 0.0, %v572
      %v574 = vpop.f32.mrf.mxu0
      %v575 = vadd.f32 0.0, %v574
      %576 = vmatmul.bf16.gmra.mxu0 %v450
      %v577 = vpop.f32.mrf.mxu0
      %v578 = vadd.f32 0.0, %v577
      %v579 = vpop.f32.mrf.mxu0
      %v580 = vadd.f32 0.0, %v579
      %581 = vmatmul.bf16.gmra.mxu0 %v453
      %v582 = vpop.f32.mrf.mxu0
      %v583 = vadd.f32 0.0, %v582
      %v584 = vpop.f32.mrf.mxu0
      %v585 = vadd.f32 0.0, %v584
      %586 = vmatmul.bf16.gmra.mxu0 %v456
      %v587 = vpop.f32.mrf.mxu0
      %v588 = vadd.f32 0.0, %v587
      %v589 = vpop.f32.mrf.mxu0
      %v590 = vadd.f32 0.0, %v589
      %591 = vmatmul.bf16.gmra.mxu0 %v459
      %v592 = vpop.f32.mrf.mxu0
      %v593 = vadd.f32 0.0, %v592
      %v594 = vpop.f32.mrf.mxu0
      %v595 = vadd.f32 0.0, %v594
      %596 = vmatmul.bf16.gmra.mxu0 %v462
      %v597 = vpop.f32.mrf.mxu0
      %v598 = vadd.f32 0.0, %v597
      %v599 = vpop.f32.mrf.mxu0
      %v600 = vadd.f32 0.0, %v599
      %601 = vmatmul.bf16.gmra.mxu0 %v465
      %v602 = vpop.f32.mrf.mxu0
      %v603 = vadd.f32 0.0, %v602
      %v604 = vpop.f32.mrf.mxu0
      %v605 = vadd.f32 0.0, %v604
      %606 = vmatmul.bf16.gmra.mxu0 %v468
      %v607 = vpop.f32.mrf.mxu0
      %v608 = vadd.f32 0.0, %v607
      %v609 = vpop.f32.mrf.mxu0
      %v610 = vadd.f32 0.0, %v609
      %611 = vmatmul.bf16.gmra.mxu0 %v471
      %v612 = vpop.f32.mrf.mxu0
      %v613 = vadd.f32 0.0, %v612
      %v614 = vpop.f32.mrf.mxu0
      %v615 = vadd.f32 0.0, %v614
      %616 = vmatmul.bf16.gmra.mxu0 %v474
      %v617 = vpop.f32.mrf.mxu0
      %v618 = vadd.f32 0.0, %v617
      %v619 = vpop.f32.mrf.mxu0
      %v620 = vadd.f32 0.0, %v619
      %621 = vmatmul.bf16.gmra.mxu0 %v477
      %v622 = vpop.f32.mrf.mxu0
      %v623 = vadd.f32 0.0, %v622
      %v624 = vpop.f32.mrf.mxu0
      %v625 = vadd.f32 0.0, %v624
      %626 = vmatmul.bf16.gmra.mxu0 %v480
      %v627 = vpop.f32.mrf.mxu0
      %v628 = vadd.f32 0.0, %v627
      %v629 = vpop.f32.mrf.mxu0
      %v630 = vadd.f32 0.0, %v629
      %631 = vmatmul.bf16.gmra.mxu0 %v483
      %v632 = vpop.f32.mrf.mxu0
      %v633 = vadd.f32 0.0, %v632
      %v634 = vpop.f32.mrf.mxu0
      %v635 = vadd.f32 0.0, %v634
      %636 = vmatmul.bf16.gmra.mxu0 %v486
      %v637 = vpop.f32.mrf.mxu0
      %v638 = vadd.f32 0.0, %v637
      %v639 = vpop.f32.mrf.mxu0
      %v640 = vadd.f32 0.0, %v639
      %641 = vmatmul.bf16.gmra.mxu0 %v489
      %v642 = vpop.f32.mrf.mxu0
      %v643 = vadd.f32 0.0, %v642
      %v644 = vpop.f32.mrf.mxu0
      %v645 = vadd.f32 0.0, %v644
      %646 = vmatmul.bf16.gmra.mxu0 %v492
      %v647 = vpop.f32.mrf.mxu0
      %v648 = vadd.f32 0.0, %v647
      %v649 = vpop.f32.mrf.mxu0
      %v650 = vadd.f32 0.0, %v649
      %651 = vmatmul.bf16.gmra.mxu0 %v495
      %v652 = vpop.f32.mrf.mxu0
      %v653 = vadd.f32 0.0, %v652
      %v654 = vpop.f32.mrf.mxu0
      %v655 = vadd.f32 0.0, %v654
      %656 = vmatmul.bf16.gmra.mxu0 %v498
      %v657 = vpop.f32.mrf.mxu0
      %v658 = vadd.f32 0.0, %v657
      %v659 = vpop.f32.mrf.mxu0
      %v660 = vadd.f32 0.0, %v659
      %661 = vmatmul.bf16.gmra.mxu0 %v501
      %v662 = vpop.f32.mrf.mxu0
      %v663 = vadd.f32 0.0, %v662
      %v664 = vpop.f32.mrf.mxu0
      %v665 = vadd.f32 0.0, %v664
      %666 = vmatmul.bf16.gmra.mxu0 %v504
      %v667 = vpop.f32.mrf.mxu0
      %v668 = vadd.f32 0.0, %v667
      %v669 = vpop.f32.mrf.mxu0
      %v670 = vadd.f32 0.0, %v669
      %671 = vmatmul.bf16.gmra.mxu0 %v507
      %v672 = vpop.f32.mrf.mxu0
      %v673 = vadd.f32 0.0, %v672
      %v674 = vpop.f32.mrf.mxu0
      %v675 = vadd.f32 0.0, %v674
      %676 = vmatmul.bf16.gmra.mxu0 %v510
      %v677 = vpop.f32.mrf.mxu0
      %v678 = vadd.f32 0.0, %v677
      %v679 = vpop.f32.mrf.mxu0
      %v680 = vadd.f32 0.0, %v679
      %681 = vmatmul.bf16.gmra.mxu0 %v513
      %v682 = vpop.f32.mrf.mxu0
      %v683 = vadd.f32 0.0, %v682
      %v684 = vpop.f32.mrf.mxu0
      %v685 = vadd.f32 0.0, %v684
      %686 = vmatmul.bf16.gmra.mxu0 %v516
      %v687 = vpop.f32.mrf.mxu0
      %v688 = vadd.f32 0.0, %v687
      %v689 = vpop.f32.mrf.mxu0
      %v690 = vadd.f32 0.0, %v689
      %691 = vmatmul.bf16.gmra.mxu0 %v519
      %v692 = vpop.f32.mrf.mxu0
      %v693 = vadd.f32 0.0, %v692
      %v694 = vpop.f32.mrf.mxu0
      %v695 = vadd.f32 0.0, %v694
      %696 = vmatmul.bf16.gmra.mxu0 %v522
      %v697 = vpop.f32.mrf.mxu0
      %v698 = vadd.f32 0.0, %v697
      %v699 = vpop.f32.mrf.mxu0
      %v700 = vadd.f32 0.0, %v699
      %701 = vmatmul.bf16.gmra.mxu0 %v525
      %v702 = vpop.f32.mrf.mxu0
      %v703 = vadd.f32 0.0, %v702
      %v704 = vpop.f32.mrf.mxu0
      %v705 = vadd.f32 0.0, %v704
      %706 = vmatmul.bf16.gmra.mxu0 %v528
      %v707 = vpop.f32.mrf.mxu0
      %v708 = vadd.f32 0.0, %v707
      %v709 = vpop.f32.mrf.mxu0
      %v710 = vadd.f32 0.0, %v709
      %711 = vmatmul.bf16.gmra.mxu0 %v531
      %v712 = vpop.f32.mrf.mxu0
      %v713 = vadd.f32 0.0, %v712
      %v714 = vpop.f32.mrf.mxu0
      %v715 = vadd.f32 0.0, %v714
      %716 = vmatmul.bf16.gmra.mxu0 %v534
      %v717 = vpop.f32.mrf.mxu0
      %v718 = vadd.f32 0.0, %v717
      %v719 = vpop.f32.mrf.mxu0
      %v720 = vadd.f32 0.0, %v719
      %721 = vmatmul.bf16.gmra.mxu0 %v537
      %v722 = vpop.f32.mrf.mxu0
      %v723 = vadd.f32 0.0, %v722
      %v724 = vpop.f32.mrf.mxu0
      %v725 = vadd.f32 0.0, %v724
      %726 = vmatmul.bf16.gmra.mxu0 %v540
      %v727 = vpop.f32.mrf.mxu0
      %v728 = vadd.f32 0.0, %v727
      %v729 = vpop.f32.mrf.mxu0
      %v730 = vadd.f32 0.0, %v729
      %731 = vmatmul.bf16.gmra.mxu0 %v543
      %v732 = vpop.f32.mrf.mxu0
      %v733 = vadd.f32 0.0, %v732
      %v734 = vpop.f32.mrf.mxu0
      %v735 = vadd.f32 0.0, %v734
      %736 = vmatmul.bf16.gmra.mxu0 %v546
      %v737 = vpop.f32.mrf.mxu0
      %v738 = vadd.f32 0.0, %v737
      %v739 = vpop.f32.mrf.mxu0
      %v740 = vadd.f32 0.0, %v739
      %741 = vmatmul.bf16.gmra.mxu0 %v549
      %v742 = vpop.f32.mrf.mxu0
      %v743 = vadd.f32 0.0, %v742
      %v744 = vpop.f32.mrf.mxu0
      %v745 = vadd.f32 0.0, %v744
      %746 = vdwg.mxu0
      %v747 = vmax.f32 %v568, %v613
      %v748 = vmax.f32 %v570, %v615
      %v749 = vmax.f32 %v573, %v618
      %v750 = vmax.f32 %v575, %v620
      %v751 = vmax.f32 %v578, %v623
      %v752 = vmax.f32 %v580, %v625
      %v753 = vmax.f32 %v583, %v628
      %v754 = vmax.f32 %v585, %v630
      %v755 = vmax.f32 %v588, %v633
      %v756 = vmax.f32 %v590, %v635
      %v757 = vmax.f32 %v593, %v638
      %v758 = vmax.f32 %v595, %v640
      %v759 = vmax.f32 %v598, %v643
      %v760 = vmax.f32 %v600, %v645
      %v761 = vmax.f32 %v603, %v648
      %v762 = vmax.f32 %v605, %v650
      %v763 = vmax.f32 %v608, %v653
      %v764 = vmax.f32 %v610, %v655
      %v765 = vmax.f32 %v658, %v703
      %v766 = vmax.f32 %v660, %v705
      %v767 = vmax.f32 %v663, %v708
      %v768 = vmax.f32 %v665, %v710
      %v769 = vmax.f32 %v668, %v713
      %v770 = vmax.f32 %v670, %v715
      %v771 = vmax.f32 %v673, %v718
      %v772 = vmax.f32 %v675, %v720
      %v773 = vmax.f32 %v678, %v723
      %v774 = vmax.f32 %v680, %v725
      %v775 = vmax.f32 %v683, %v728
      %v776 = vmax.f32 %v685, %v730
      %v777 = vmax.f32 %v688, %v733
      %v778 = vmax.f32 %v690, %v735
      %v779 = vmax.f32 %v693, %v738
      %v780 = vmax.f32 %v695, %v740
      %v781 = vmax.f32 %v698, %v743
      %v782 = vmax.f32 %v700, %v745
      %v783 = vmax.f32 %v747, %v765
      %v784 = vmax.f32 %v748, %v766
      %v785 = vmax.f32 %v749, %v767
      %v786 = vmax.f32 %v750, %v768
      %v787 = vmax.f32 %v751, %v769
      %v788 = vmax.f32 %v752, %v770
      %v789 = vmax.f32 %v753, %v771
      %v790 = vmax.f32 %v754, %v772
      %v791 = vmax.f32 %v755, %v773
      %v792 = vmax.f32 %v756, %v774
      %v793 = vmax.f32 %v757, %v775
      %v794 = vmax.f32 %v758, %v776
      %v795 = vmax.f32 %v759, %v777
      %v796 = vmax.f32 %v760, %v778
      %v797 = vmax.f32 %v761, %v779
      %v798 = vmax.f32 %v762, %v780
      %v799 = vmax.f32 %v763, %v781
      %v800 = vmax.f32 %v764, %v782
      %v801 = vld [vmem:[%s2] sm:$0x1]
      %v803 = vperm.slane %v801, 0
      %v805 = vadd.f32 %v783, %v803
      %v806 = vadd.f32 %v784, %v803
      %v807 = vadd.f32 %v785, %v803
      %v808 = vadd.f32 %v786, %v803
      %v809 = vadd.f32 %v787, %v803
      %v810 = vadd.f32 %v788, %v803
      %v811 = vadd.f32 %v789, %v803
      %v812 = vadd.f32 %v790, %v803
      %v813 = vadd.f32 %v791, %v803
      %v814 = vadd.f32 %v792, %v803
      %v815 = vadd.f32 %v793, %v803
      %v816 = vadd.f32 %v794, %v803
      %v817 = vadd.f32 %v795, %v803
      %v818 = vadd.f32 %v796, %v803
      %v819 = vadd.f32 %v797, %v803
      %v820 = vadd.f32 %v798, %v803
      %v821 = vadd.f32 %v799, %v803
      %v822 = vadd.f32 %v800, %v803
      %v823 = vmax.f32 %v805, 0.0
      %v824 = vmax.f32 %v806, 0.0
      %v825 = vmax.f32 %v807, 0.0
      %v826 = vmax.f32 %v808, 0.0
      %v827 = vmax.f32 %v809, 0.0
      %v828 = vmax.f32 %v810, 0.0
      %v829 = vmax.f32 %v811, 0.0
      %v830 = vmax.f32 %v812, 0.0
      %v831 = vmax.f32 %v813, 0.0
      %v832 = vmax.f32 %v814, 0.0
      %v833 = vmax.f32 %v815, 0.0
      %v834 = vmax.f32 %v816, 0.0
      %v835 = vmax.f32 %v817, 0.0
      %v836 = vmax.f32 %v818, 0.0
      %v837 = vmax.f32 %v819, 0.0
      %v838 = vmax.f32 %v820, 0.0
      %v839 = vmax.f32 %v821, 0.0
      %v840 = vmax.f32 %v822, 0.0
      %v841 = vpack.c.bf16 %v823, %v823
      %v842 = vpack.c.bf16 %v824, %v824
      %v843 = vpack.c.bf16 %v825, %v825
      %v844 = vpack.c.bf16 %v826, %v826
      %v845 = vpack.c.bf16 %v827, %v827
      %v846 = vpack.c.bf16 %v828, %v828
      %v847 = vpack.c.bf16 %v829, %v829
      %v848 = vpack.c.bf16 %v830, %v830
      %v849 = vpack.c.bf16 %v831, %v831
      %v850 = vpack.c.bf16 %v832, %v832
      %v851 = vpack.c.bf16 %v833, %v833
      %v852 = vpack.c.bf16 %v834, %v834
      %v853 = vpack.c.bf16 %v835, %v835
      %v854 = vpack.c.bf16 %v836, %v836
      %v855 = vpack.c.bf16 %v837, %v837
      %v856 = vpack.c.bf16 %v838, %v838
      %v857 = vpack.c.bf16 %v839, %v839
      %v858 = vpack.c.bf16 %v840, %v840
      %859 = vst [vmem:[%s172] sm:$0xf] %v841
      %860 = vst [vmem:[%s172 + $0x4] sm:$0xf] %v842
      %861 = vst [vmem:[%s172 + $0x8] sm:$0xf] %v843
      %862 = vst [vmem:[%s172 + $0xc] sm:$0xf] %v844
      %863 = vst [vmem:[%s172 + $0x10] sm:$0xf] %v845
      %864 = vst [vmem:[%s172 + $0x14] sm:$0xf] %v846
      %865 = vst [vmem:[%s172 + $0x18] sm:$0xf] %v847
      %866 = vst [vmem:[%s172 + $0x1c] sm:$0xf] %v848
      %867 = vst [vmem:[%s172 + $0x20] sm:$0xf] %v849
      %868 = vst [vmem:[%s172 + $0x24] sm:$0xf] %v850
      %869 = vst [vmem:[%s172 + $0x28] sm:$0xf] %v851
      %870 = vst [vmem:[%s172 + $0x2c] sm:$0xf] %v852
      %871 = vst [vmem:[%s172 + $0x30] sm:$0xf] %v853
      %872 = vst [vmem:[%s172 + $0x34] sm:$0xf] %v854
      %873 = vst [vmem:[%s172 + $0x38] sm:$0xf] %v855
      %874 = vst [vmem:[%s172 + $0x3c] sm:$0xf] %v856
      %875 = vst [vmem:[%s172 + $0x40] sm:$0xf] %v857
      %876 = vst [vmem:[%s172 + $0x44] sm:$0xf] %v858
      %s877 = smul.u32 18, %s14
      %p878 = scmp.lt.s32.totalorder %s877, 35
      %s879 = scalar_select %p878, %s877, 35
      %s880 = smul.addr %s879, 4
      %s881 = scalar_lea.vmem %s3, %s880
      // Predicated region
      $region33: #{convnet_forward.3} parent=31 // pred_check
        %p882 = pneg %p100
      $region34: #{convnet_forward.3} parent=31 // pred_check_branch
        %884 = sbr.rel (%p882) target = $region36
      $region35: #{convnet_forward.3} parent=31 // pred_region
        %s885 = smul.u32 18, %s14
      $region36: #{convnet_forward.3} parent=31 // pred_fallthru
        _
    $region32: #{convnet_forward.3} parent=5 // pred_fallthru
      _
    %p886 = scmp.le.s32.totalorder 2, %s9
    // Predicated region
    $region37: #{convnet_forward.3} parent=5 // pred_check
      %p887 = pneg %p886
    $region38: #{convnet_forward.3} parent=5 // pred_check_branch
      %889 = sbr.rel (%p887) target = $region40
    $region39: #{convnet_forward.3} parent=5 // pred_region
      %s890 = ssub.s32 %s9, 2
      // Predicated region
      $region41: #{convnet_forward.3} parent=39 // pred_check
        %p891 = pneg %p106
      $region42: #{convnet_forward.3} parent=39 // pred_check_branch
        %893 = sbr.rel (%p891) target = $region44
      $region43: #{convnet_forward.3} parent=39 // pred_region
        %s894 = smul.u32 18, %s15
        %p895 = scmp.lt.s32.totalorder %s894, 35
        %s896 = scalar_select %p895, %s894, 35
        %s897 = smul.addr %s896, 4
        %s898 = scalar_lea.vmem %s3, %s897
      $region44: #{convnet_forward.3} parent=39 // pred_fallthru
        _
    $region40: #{convnet_forward.3} parent=5 // pred_fallthru
      _
  $region6: #{convnet_forward.3} parent=0 // loop_footer
    %s13 = sadd.s32 1, %s9
  $region7: #{convnet_forward.3} parent=0 // loop_footer_branch
    %8 = sbr.rel target = $region3
  $region8: #{convnet_forward.3} parent=0 // loop_exit
    _

// kernel: convnet_forward.4
$region0: #{convnet_forward.4}
  #allocation0 [shape = 'u32[]', space=smem, size = 0x4, offset = 0x4, fixed_abs, tag = 'smem constant byte address 0x4 - core index']
  #allocation1 [shape = 'u32[72,128]{1,0:T(1,128)}', space=vmem, size = 0x9000, scoped, tag = 'internal scratch']
  %s0 = inlined_call_operand.vmem [shape: bf16[224,90], index: 0, kind: input, shape index: {}]
  %s1 = inlined_call_operand.vmem [shape: bf16[90,128], index: 1, kind: input, shape index: {}]
  %s2 = inlined_call_operand.vmem [shape: f32[1,128], index: 2, kind: input, shape index: {}]
  %s3 = inlined_call_operand.vmem [shape: bf16[56,128], index: 3, kind: output, shape index: {}]
  %s4 = sld [smem:[#allocation0]]
  $region22: #{convnet_forward.4} parent=0
    _
  %s6 = ssub.s32 1, %s4
  %s7 = scalar_select 0, %s6, %s4
  // Predicated region
  $region2: #{convnet_forward.4} parent=0 // pred_check
    _
  $region3: #{convnet_forward.4} parent=0 // pred_check_branch
    %9 = sbr.rel (0) target = $region5
  $region4: #{convnet_forward.4} parent=0 // pred_region
    _
  $region5: #{convnet_forward.4} parent=0 // pred_fallthru
    _
  // Predicated region
  $region6: #{convnet_forward.4} parent=0 // pred_check
    _
  $region7: #{convnet_forward.4} parent=0 // pred_check_branch
    %11 = sbr.rel (0) target = $region9
  $region8: #{convnet_forward.4} parent=0 // pred_region
    _
  $region9: #{convnet_forward.4} parent=0 // pred_fallthru
    _
  // Predicated region
  $region10: #{convnet_forward.4} parent=0 // pred_check
    _
  $region11: #{convnet_forward.4} parent=0 // pred_check_branch
    %13 = sbr.rel (0) target = $region13
  $region12: #{convnet_forward.4} parent=0 // pred_region
    _
  $region13: #{convnet_forward.4} parent=0 // pred_fallthru
    _
  %v15 = vld [vmem:[%s0] sm:$0xf]
  %v16 = vld [vmem:[%s0 + $0x4] sm:$0xf]
  %v17 = vld [vmem:[%s0 + $0x8] sm:$0xf]
  %v18 = vld [vmem:[%s0 + $0xc] sm:$0xf]
  %v19 = vld [vmem:[%s0 + $0x10] sm:$0xf]
  %v20 = vld [vmem:[%s0 + $0x14] sm:$0xf]
  %v21 = vld [vmem:[%s0 + $0x18] sm:$0xf]
  %v22 = vld [vmem:[%s0 + $0x1c] sm:$0xf]
  %v23 = vld [vmem:[%s0 + $0x20] sm:$0xf]
  %v24 = vld [vmem:[%s0 + $0x24] sm:$0xf]
  %v25 = vld [vmem:[%s0 + $0x28] sm:$0xf]
  %v26 = vld [vmem:[%s0 + $0x2c] sm:$0xf]
  %v27 = vld [vmem:[%s0 + $0x30] sm:$0xf]
  %v28 = vld [vmem:[%s0 + $0x34] sm:$0xf]
  %v29 = vld [vmem:[%s0 + $0x38] sm:$0xf]
  %v30 = vld [vmem:[%s0 + $0x3c] sm:$0xf]
  %v31 = vld [vmem:[%s0 + $0x40] sm:$0xf]
  %v32 = vld [vmem:[%s0 + $0x44] sm:$0xf]
  %v33 = vld [vmem:[%s0 + $0x48] sm:$0xf]
  %v34 = vld [vmem:[%s0 + $0x4c] sm:$0xf]
  %v35 = vld [vmem:[%s0 + $0x50] sm:$0xf]
  %v36 = vld [vmem:[%s0 + $0x54] sm:$0xf]
  %v37 = vld [vmem:[%s0 + $0x58] sm:$0xf]
  %v38 = vld [vmem:[%s0 + $0x5c] sm:$0xf]
  %v39 = vld [vmem:[%s0 + $0x60] sm:$0xf]
  %v40 = vld [vmem:[%s0 + $0x64] sm:$0xf]
  %v41 = vld [vmem:[%s0 + $0x68] sm:$0xf]
  %v42 = vld [vmem:[%s0 + $0x6c] sm:$0xf]
  %v43 = vld [vmem:[%s1] sm:$0xf]
  %v44 = vld [vmem:[%s1 + $0x4] sm:$0xf]
  %v45 = vld [vmem:[%s1 + $0x8] sm:$0xf]
  %v46 = vld [vmem:[%s1 + $0xc] sm:$0xf]
  %v47 = vld [vmem:[%s1 + $0x10] sm:$0xf]
  %v48 = vld [vmem:[%s1 + $0x14] sm:$0xf]
  %v49 = vld [vmem:[%s1 + $0x18] sm:$0xf]
  %v50 = vld [vmem:[%s1 + $0x1c] sm:$0xf]
  %v51 = vld [vmem:[%s1 + $0x20] sm:$0xf]
  %v52 = vld [vmem:[%s1 + $0x24] sm:$0xf]
  %v53 = vld [vmem:[%s1 + $0x28] sm:$0xf]
  %v54 = vld [vmem:[%s1 + $0x2c] sm:$0x1]
  %v83 = vunpack.c.l.b16 %v15
  %v84 = vunpack.c.l.b16 %v16
  %v85 = vunpack.c.l.b16 %v17
  %v86 = vunpack.c.l.b16 %v18
  %v87 = vunpack.c.l.b16 %v19
  %v88 = vunpack.c.l.b16 %v20
  %v89 = vunpack.c.l.b16 %v21
  %v90 = vunpack.c.l.b16 %v22
  %v91 = vunpack.c.l.b16 %v23
  %v92 = vunpack.c.l.b16 %v24
  %v93 = vunpack.c.l.b16 %v25
  %v94 = vunpack.c.l.b16 %v26
  %v95 = vunpack.c.l.b16 %v27
  %v96 = vunpack.c.l.b16 %v28
  %v97 = vunpack.c.l.b16 %v29
  %v98 = vunpack.c.l.b16 %v30
  %v99 = vunpack.c.l.b16 %v31
  %v100 = vunpack.c.l.b16 %v32
  %v101 = vunpack.c.l.b16 %v33
  %v102 = vunpack.c.l.b16 %v34
  %v103 = vunpack.c.l.b16 %v35
  %v104 = vunpack.c.l.b16 %v36
  %v105 = vunpack.c.l.b16 %v37
  %v106 = vunpack.c.l.b16 %v38
  %v107 = vunpack.c.l.b16 %v39
  %v108 = vunpack.c.l.b16 %v40
  %v109 = vunpack.c.l.b16 %v41
  %v110 = vunpack.c.l.b16 %v42
  %v111 = vpack.c.b16 %v84, %v83
  %v112 = vpack.c.b16 %v86, %v85
  %v113 = vpack.c.b16 %v88, %v87
  %v114 = vpack.c.b16 %v90, %v89
  %v115 = vpack.c.b16 %v92, %v91
  %v116 = vpack.c.b16 %v94, %v93
  %v117 = vpack.c.b16 %v96, %v95
  %v118 = vpack.c.b16 %v98, %v97
  %v119 = vpack.c.b16 %v100, %v99
  %v120 = vpack.c.b16 %v102, %v101
  %v121 = vpack.c.b16 %v104, %v103
  %v122 = vpack.c.b16 %v106, %v105
  %v123 = vpack.c.b16 %v108, %v107
  %v124 = vpack.c.b16 %v110, %v109
  %v137 = vunpack.c.l.b16 %v43
  %v138 = vunpack.c.l.b16 %v44
  %v139 = vunpack.c.l.b16 %v45
  %v140 = vunpack.c.l.b16 %v46
  %v141 = vunpack.c.l.b16 %v47
  %v142 = vunpack.c.l.b16 %v48
  %v143 = vunpack.c.l.b16 %v49
  %v144 = vunpack.c.l.b16 %v50
  %v145 = vunpack.c.l.b16 %v51
  %v146 = vunpack.c.l.b16 %v52
  %v147 = vunpack.c.l.b16 %v53
  %v148 = vunpack.c.l.b16 %v54
  %v149 = vpack.c.b16 %v138, %v137
  %v150 = vpack.c.b16 %v140, %v139
  %v151 = vpack.c.b16 %v142, %v141
  %v152 = vpack.c.b16 %v144, %v143
  %v153 = vpack.c.b16 %v146, %v145
  %v154 = vpack.c.b16 %v148, %v147
  %vm160 = vcmask 736256
  %v162 = vsel %vm160, %v111, 0
  %v165 = vsel %vm160, %v112, 0
  %v168 = vsel %vm160, %v113, 0
  %v171 = vsel %vm160, %v114, 0
  %v174 = vsel %vm160, %v115, 0
  %v177 = vsel %vm160, %v116, 0
  %v180 = vsel %vm160, %v117, 0
  %v183 = vsel %vm160, %v118, 0
  %v186 = vsel %vm160, %v119, 0
  %v189 = vsel %vm160, %v120, 0
  %v192 = vsel %vm160, %v121, 0
  %v195 = vsel %vm160, %v122, 0
  %v198 = vsel %vm160, %v123, 0
  %v201 = vsel %vm160, %v124, 0
  %vm203 = vcmask 1044480
  %v205 = vsel %vm203, %v154, 0
  %207 = vmatpush.bf16.msra.mxu0 0
  %208 = vmatpush.bf16.msra.mxu0 0
  %209 = vmatpush.bf16.msra.mxu0 %v205
  %210 = vmatpush.bf16.msra.mxu0 %v153
  %211 = vmatpush.bf16.msra.mxu0 %v152
  %212 = vmatpush.bf16.msra.mxu0 %v151
  %213 = vmatpush.bf16.msra.mxu0 %v150
  %214 = vmatpush.bf16.msra.mxu0 %v149
  %215 = vmatmul.bf16.gmra.mxu0 %v162
  %v216 = vpop.f32.mrf.mxu0
  %v217 = vadd.f32 0.0, %v216
  %v218 = vpop.f32.mrf.mxu0
  %v219 = vadd.f32 0.0, %v218
  %220 = vmatmul.bf16.gmra.mxu0 %v165
  %v221 = vpop.f32.mrf.mxu0
  %v222 = vadd.f32 0.0, %v221
  %v223 = vpop.f32.mrf.mxu0
  %v224 = vadd.f32 0.0, %v223
  %225 = vmatmul.bf16.gmra.mxu0 %v168
  %v226 = vpop.f32.mrf.mxu0
  %v227 = vadd.f32 0.0, %v226
  %v228 = vpop.f32.mrf.mxu0
  %v229 = vadd.f32 0.0, %v228
  %230 = vmatmul.bf16.gmra.mxu0 %v171
  %v231 = vpop.f32.mrf.mxu0
  %v232 = vadd.f32 0.0, %v231
  %v233 = vpop.f32.mrf.mxu0
  %v234 = vadd.f32 0.0, %v233
  %235 = vmatmul.bf16.gmra.mxu0 %v174
  %v236 = vpop.f32.mrf.mxu0
  %v237 = vadd.f32 0.0, %v236
  %v238 = vpop.f32.mrf.mxu0
  %v239 = vadd.f32 0.0, %v238
  %240 = vmatmul.bf16.gmra.mxu0 %v177
  %v241 = vpop.f32.mrf.mxu0
  %v242 = vadd.f32 0.0, %v241
  %v243 = vpop.f32.mrf.mxu0
  %v244 = vadd.f32 0.0, %v243
  %245 = vmatmul.bf16.gmra.mxu0 %v180
  %v246 = vpop.f32.mrf.mxu0
  %v247 = vadd.f32 0.0, %v246
  %v248 = vpop.f32.mrf.mxu0
  %v249 = vadd.f32 0.0, %v248
  %250 = vmatmul.bf16.gmra.mxu0 %v183
  %v251 = vpop.f32.mrf.mxu0
  %v252 = vadd.f32 0.0, %v251
  %v253 = vpop.f32.mrf.mxu0
  %v254 = vadd.f32 0.0, %v253
  %255 = vmatmul.bf16.gmra.mxu0 %v186
  %v256 = vpop.f32.mrf.mxu0
  %v257 = vadd.f32 0.0, %v256
  %v258 = vpop.f32.mrf.mxu0
  %v259 = vadd.f32 0.0, %v258
  %260 = vmatmul.bf16.gmra.mxu0 %v189
  %v261 = vpop.f32.mrf.mxu0
  %v262 = vadd.f32 0.0, %v261
  %v263 = vpop.f32.mrf.mxu0
  %v264 = vadd.f32 0.0, %v263
  %265 = vmatmul.bf16.gmra.mxu0 %v192
  %v266 = vpop.f32.mrf.mxu0
  %v267 = vadd.f32 0.0, %v266
  %v268 = vpop.f32.mrf.mxu0
  %v269 = vadd.f32 0.0, %v268
  %270 = vmatmul.bf16.gmra.mxu0 %v195
  %v271 = vpop.f32.mrf.mxu0
  %v272 = vadd.f32 0.0, %v271
  %v273 = vpop.f32.mrf.mxu0
  %v274 = vadd.f32 0.0, %v273
  %275 = vmatmul.bf16.gmra.mxu0 %v198
  %v276 = vpop.f32.mrf.mxu0
  %v277 = vadd.f32 0.0, %v276
  %v278 = vpop.f32.mrf.mxu0
  %v279 = vadd.f32 0.0, %v278
  %280 = vmatmul.bf16.gmra.mxu0 %v201
  %v281 = vpop.f32.mrf.mxu0
  %v282 = vadd.f32 0.0, %v281
  %v283 = vpop.f32.mrf.mxu0
  %v284 = vadd.f32 0.0, %v283
  %285 = vdwg.mxu0
  %v286 = vmax.f32 %v217, %v234
  %v287 = vmax.f32 %v219, %v237
  %v288 = vmax.f32 %v222, %v239
  %v289 = vmax.f32 %v224, %v242
  %v290 = vmax.f32 %v227, %v244
  %v291 = vmax.f32 %v229, %v247
  %v292 = vmax.f32 %v232, %v249
  %v293 = vmax.f32 %v252, %v269
  %v294 = vmax.f32 %v254, %v272
  %v295 = vmax.f32 %v257, %v274
  %v296 = vmax.f32 %v259, %v277
  %v297 = vmax.f32 %v262, %v279
  %v298 = vmax.f32 %v264, %v282
  %v299 = vmax.f32 %v267, %v284
  %v300 = vmax.f32 %v286, %v293
  %v301 = vmax.f32 %v287, %v294
  %v302 = vmax.f32 %v288, %v295
  %v303 = vmax.f32 %v289, %v296
  %v304 = vmax.f32 %v290, %v297
  %v305 = vmax.f32 %v291, %v298
  %v306 = vmax.f32 %v292, %v299
  %v307 = vld [vmem:[%s2] sm:$0x1]
  %v309 = vperm.slane %v307, 0
  %v311 = vadd.f32 %v300, %v309
  %v312 = vadd.f32 %v301, %v309
  %v313 = vadd.f32 %v302, %v309
  %v314 = vadd.f32 %v303, %v309
  %v315 = vadd.f32 %v304, %v309
  %v316 = vadd.f32 %v305, %v309
  %v317 = vadd.f32 %v306, %v309
  %v318 = vmax.f32 %v311, 0.0
  %v319 = vmax.f32 %v312, 0.0
  %v320 = vmax.f32 %v313, 0.0
  %v321 = vmax.f32 %v314, 0.0
  %v322 = vmax.f32 %v315, 0.0
  %v323 = vmax.f32 %v316, 0.0
  %v324 = vmax.f32 %v317, 0.0
  %v325 = vpack.c.bf16 %v318, %v318
  %v326 = vpack.c.bf16 %v319, %v319
  %v327 = vpack.c.bf16 %v320, %v320
  %v328 = vpack.c.bf16 %v321, %v321
  %v329 = vpack.c.bf16 %v322, %v322
  %v330 = vpack.c.bf16 %v323, %v323
  %v331 = vpack.c.bf16 %v324, %v324
  %332 = vst [vmem:[%s3] sm:$0xf] %v325
  %333 = vst [vmem:[%s3 + $0x4] sm:$0xf] %v326
  %334 = vst [vmem:[%s3 + $0x8] sm:$0xf] %v327
  %335 = vst [vmem:[%s3 + $0xc] sm:$0xf] %v328
  %336 = vst [vmem:[%s3 + $0x10] sm:$0xf] %v329
  %337 = vst [vmem:[%s3 + $0x14] sm:$0xf] %v330
  %338 = vst [vmem:[%s3 + $0x18] sm:$0xf] %v331
  // Predicated region
  $region14: #{convnet_forward.4} parent=0 // pred_check
    _
  $region15: #{convnet_forward.4} parent=0 // pred_check_branch
    %340 = sbr.rel (0) target = $region17
  $region16: #{convnet_forward.4} parent=0 // pred_region
    _
  $region17: #{convnet_forward.4} parent=0 // pred_fallthru
    _
  // Predicated region
  $region18: #{convnet_forward.4} parent=0 // pred_check
    _
  $region19: #{convnet_forward.4} parent=0 // pred_check_branch
    %342 = sbr.rel (0) target = $region21
  $region20: #{convnet_forward.4} parent=0 // pred_region
    _
  $region21: #{convnet_forward.4} parent=0 // pred_fallthru
    _

// kernel: convnet_forward.5
$region0: #{convnet_forward.5}
  #allocation0 [shape = 'u32[]', space=smem, size = 0x4, offset = 0x4, fixed_abs, tag = 'smem constant byte address 0x4 - core index']
  #allocation1 [shape = 'u32[72,128]{1,0:T(1,128)}', space=vmem, size = 0x9000, scoped, tag = 'internal scratch']
  #allocation2 [shape = 'f32[2,512]{1,0:T(2,128)}', space=vmem, size = 0x1000, scoped, tag = 'scratch operand']
  %s0 = inlined_call_operand.vmem [shape: bf16[2,512], index: 0, kind: input, shape index: {}]
  %s1 = inlined_call_operand.vmem [shape: bf16[512,512], index: 1, kind: input, shape index: {}]
  %s2 = inlined_call_operand.vmem [shape: f32[1,512], index: 2, kind: input, shape index: {}]
  %s3 = inlined_call_operand.vmem [shape: bf16[512,128], index: 3, kind: input, shape index: {}]
  %s4 = inlined_call_operand.vmem [shape: f32[1,128], index: 4, kind: input, shape index: {}]
  %s5 = inlined_call_operand.hbm [shape: f32[2,128], index: 5, kind: output, shape index: {}]
  %s6 = sld [smem:[#allocation0]]
  $region61: #{convnet_forward.5} parent=0
    _
  %s8 = ssub.s32 1, %s6
  %s9 = scalar_select 0, %s8, %s6
  $region1: #{convnet_forward.5} parent=0
    #allocation3 [shape = 'u8[1024]{0}', space=vmem, size = 0x400, scoped, tag = 'output window, operand 0, single buffered']
    #allocation4 [shape = 's32[2]{0}', space=sflag, size = 0x8, scoped, tag = 'scoped memory for convnet_forward.5']
    %10 = vsyncpa [#allocation4], 0
    loop: start=0, step=1, limit=6
    $region2: #{convnet_forward.5} parent=1 // loop_pre_header
      _
    $region3: #{convnet_forward.5} parent=1 // loop_header
      %s12 = sphi 0, %s16
      %p13 = scmp.ge.s32.totalorder %s12, 6
      %s22 = sphi 0, %s24
      %s25 = sphi 0, %s22
      %s26 = sphi 0, %s25
      %s42 = sphi 0, %s26
      %s48 = sphi 0, %s50
      %s51 = sphi 0, %s48
      %s52 = sphi 0, %s51
      %s68 = sphi 0, %s52
      %s72 = sphi 0, %s72
      %s74 = sphi 0, %s72
      %s75 = sphi 0, %s74
      %s89 = sphi 0, %s75
      %s93 = sphi 0, %s93
      %s95 = sphi 0, %s93
      %s96 = sphi 0, %s95
      %s110 = sphi 0, %s96
      %s114 = sphi 0, %s114
      %s116 = sphi 0, %s114
      %s117 = sphi 0, %s116
      %s131 = sphi 0, %s117
      %s135 = sphi 0, %s135
      %s137 = sphi 0, %s135
      %s138 = sphi 0, %s137
      %s152 = sphi 0, %s138
    $region4: #{convnet_forward.5} parent=1 // loop_header_branch
      %15 = sbr.rel (%p13) target = $region8
    $region5: #{convnet_forward.5} parent=1 // loop_body
      %s17 = ssub.s32 %s12, 1
      %s18 = ssub.s32 %s12, 2
      %s19 = sadd.s32 %s12, 1
      %s20 = ssub.s32 %s12, %s19
      %p21 = scmp.eq.s32.totalorder %s20, 0
      %s23 = sadd.s32 %s22, 1
      %s24 = scalar_select %p21, %s22, %s23
      %p27 = pneg %p21
      %p28 = scmp.eq.s32.totalorder %s12, 3
      %p29 = por %p27, %p28
      %p30 = scmp.ne.s32.totalorder %s22, %s25
      %p31 = scmp.eq.s32.totalorder %s12, 0
      %p32 = por %p30, %p31
      %p33 = scmp.ne.s32.totalorder %s22, %s25
      %p34 = scmp.eq.s32.totalorder %s17, 3
      %p35 = por %p33, %p34
      %p36 = scmp.ne.s32.totalorder %s25, %s26
      %p37 = scmp.eq.s32.totalorder %s17, 0
      %p38 = por %p36, %p37
      %p39 = scmp.ne.s32.totalorder %s25, %s26
      %p40 = scmp.eq.s32.totalorder %s18, 3
      %p41 = por %p39, %p40
      %p43 = scmp.ne.s32.totalorder %s26, %s42
      %p44 = scmp.eq.s32.totalorder %s18, 0
      %p45 = por %p43, %p44
      %s46 = ssub.s32 %s12, %s19
      %p47 = scmp.eq.s32.totalorder %s46, 0
      %s49 = sadd.s32 %s48, 1
      %s50 = scalar_select %p47, %s48, %s49
      %p53 = pneg %p47
      %p54 = scmp.eq.s32.totalorder %s12, 3
      %p55 = por %p53, %p54
      %p56 = scmp.ne.s32.totalorder %s48, %s51
      %p57 = scmp.eq.s32.totalorder %s12, 0
      %p58 = por %p56, %p57
      %p59 = scmp.ne.s32.totalorder %s48, %s51
      %p60 = scmp.eq.s32.totalorder %s17, 3
      %p61 = por %p59, %p60
      %p62 = scmp.ne.s32.totalorder %s51, %s52
      %p63 = scmp.eq.s32.totalorder %s17, 0
      %p64 = por %p62, %p63
      %p65 = scmp.ne.s32.totalorder %s51, %s52
      %p66 = scmp.eq.s32.totalorder %s18, 3
      %p67 = por %p65, %p66
      %p69 = scmp.ne.s32.totalorder %s52, %s68
      %p70 = scmp.eq.s32.totalorder %s18, 0
      %p71 = por %p69, %p70
      %s73 = sadd.s32 %s72, 1
      %p76 = scmp.eq.s32.totalorder %s12, 3
      %p77 = scmp.ne.s32.totalorder %s72, %s74
      %p78 = scmp.eq.s32.totalorder %s12, 0
      %p79 = por %p77, %p78
      %p80 = scmp.ne.s32.totalorder %s72, %s74
      %p81 = scmp.eq.s32.totalorder %s17, 3
      %p82 = por %p80, %p81
      %p83 = scmp.ne.s32.totalorder %s74, %s75
      %p84 = scmp.eq.s32.totalorder %s17, 0
      %p85 = por %p83, %p84
      %p86 = scmp.ne.s32.totalorder %s74, %s75
      %p87 = scmp.eq.s32.totalorder %s18, 3
      %p88 = por %p86, %p87
      %p90 = scmp.ne.s32.totalorder %s75, %s89
      %p91 = scmp.eq.s32.totalorder %s18, 0
      %p92 = por %p90, %p91
      %s94 = sadd.s32 %s93, 1
      %p97 = scmp.eq.s32.totalorder %s12, 3
      %p98 = scmp.ne.s32.totalorder %s93, %s95
      %p99 = scmp.eq.s32.totalorder %s12, 0
      %p100 = por %p98, %p99
      %p101 = scmp.ne.s32.totalorder %s93, %s95
      %p102 = scmp.eq.s32.totalorder %s17, 3
      %p103 = por %p101, %p102
      %p104 = scmp.ne.s32.totalorder %s95, %s96
      %p105 = scmp.eq.s32.totalorder %s17, 0
      %p106 = por %p104, %p105
      %p107 = scmp.ne.s32.totalorder %s95, %s96
      %p108 = scmp.eq.s32.totalorder %s18, 3
      %p109 = por %p107, %p108
      %p111 = scmp.ne.s32.totalorder %s96, %s110
      %p112 = scmp.eq.s32.totalorder %s18, 0
      %p113 = por %p111, %p112
      %s115 = sadd.s32 %s114, 1
      %p118 = scmp.eq.s32.totalorder %s12, 3
      %p119 = scmp.ne.s32.totalorder %s114, %s116
      %p120 = scmp.eq.s32.totalorder %s12, 0
      %p121 = por %p119, %p120
      %p122 = scmp.ne.s32.totalorder %s114, %s116
      %p123 = scmp.eq.s32.totalorder %s17, 3
      %p124 = por %p122, %p123
      %p125 = scmp.ne.s32.totalorder %s116, %s117
      %p126 = scmp.eq.s32.totalorder %s17, 0
      %p127 = por %p125, %p126
      %p128 = scmp.ne.s32.totalorder %s116, %s117
      %p129 = scmp.eq.s32.totalorder %s18, 3
      %p130 = por %p128, %p129
      %p132 = scmp.ne.s32.totalorder %s117, %s131
      %p133 = scmp.eq.s32.totalorder %s18, 0
      %p134 = por %p132, %p133
      %s136 = sadd.s32 %s135, 1
      %p139 = scmp.eq.s32.totalorder %s12, 3
      %p140 = scmp.ne.s32.totalorder %s135, %s137
      %p141 = scmp.eq.s32.totalorder %s12, 0
      %p142 = por %p140, %p141
      %p143 = scmp.ne.s32.totalorder %s135, %s137
      %p144 = scmp.eq.s32.totalorder %s17, 3
      %p145 = por %p143, %p144
      %p146 = scmp.ne.s32.totalorder %s137, %s138
      %p147 = scmp.eq.s32.totalorder %s17, 0
      %p148 = por %p146, %p147
      %p149 = scmp.ne.s32.totalorder %s137, %s138
      %p150 = scmp.eq.s32.totalorder %s18, 3
      %p151 = por %p149, %p150
      %p153 = scmp.ne.s32.totalorder %s138, %s152
      %p154 = scmp.eq.s32.totalorder %s18, 0
      %p155 = por %p153, %p154
      %p156 = scmp.le.s32.totalorder 1, %s12
      %p157 = scmp.lt.s32.totalorder %s12, 5
      %p158 = pnand %p156, %p157
      %p159 = pneg %p158
      // Predicated region
      $region9: #{convnet_forward.5} parent=5 // pred_check
        _
      $region10: #{convnet_forward.5} parent=5 // pred_check_branch
        %161 = sbr.rel (%p158) target = $region12
      $region11: #{convnet_forward.5} parent=5 // pred_region
        %s162 = ssub.s32 %s12, 1
        // Predicated region
        $region13: #{convnet_forward.5} parent=11 // pred_check
          %p163 = pneg %p85
        $region14: #{convnet_forward.5} parent=11 // pred_check_branch
          %165 = sbr.rel (%p163) target = $region16
        $region15: #{convnet_forward.5} parent=11 // pred_region
          _
        $region16: #{convnet_forward.5} parent=11 // pred_fallthru
          _
        // Predicated region
        $region17: #{convnet_forward.5} parent=11 // pred_check
          %p166 = pneg %p106
        $region18: #{convnet_forward.5} parent=11 // pred_check_branch
          %168 = sbr.rel (%p166) target = $region20
        $region19: #{convnet_forward.5} parent=11 // pred_region
          _
        $region20: #{convnet_forward.5} parent=11 // pred_fallthru
          _
        // Predicated region
        $region21: #{convnet_forward.5} parent=11 // pred_check
          %p169 = pneg %p127
        $region22: #{convnet_forward.5} parent=11 // pred_check_branch
          %171 = sbr.rel (%p169) target = $region24
        $region23: #{convnet_forward.5} parent=11 // pred_region
          _
        $region24: #{convnet_forward.5} parent=11 // pred_fallthru
          _
      $region12: #{convnet_forward.5} parent=5 // pred_fallthru
        _
      %p172 = scmp.lt.s32.totalorder %s12, 4
      // Predicated region
      $region25: #{convnet_forward.5} parent=5 // pred_check
        %p173 = pneg %p172
      $region26: #{convnet_forward.5} parent=5 // pred_check_branch
        %175 = sbr.rel (%p173) target = $region28
      $region27: #{convnet_forward.5} parent=5 // pred_region
        // Predicated region
        $region29: #{convnet_forward.5} parent=27 // pred_check
          %p176 = pneg %p32
        $region30: #{convnet_forward.5} parent=27 // pred_check_branch
          %178 = sbr.rel (%p176) target = $region32
        $region31: #{convnet_forward.5} parent=27 // pred_region
          %p179 = scmp.lt.s32.totalorder %s12, 3
          %s180 = scalar_select %p179, %s12, 3
          %s181 = scalar_lea.vmem %s0, %s180
        $region32: #{convnet_forward.5} parent=27 // pred_fallthru
          _
        // Predicated region
        $region33: #{convnet_forward.5} parent=27 // pred_check
          %p182 = pneg %p58
        $region34: #{convnet_forward.5} parent=27 // pred_check_branch
          %184 = sbr.rel (%p182) target = $region36
        $region35: #{convnet_forward.5} parent=27 // pred_region
          %s185 = smul.u32 16, %s12
          %p186 = scmp.lt.s32.totalorder %s185, 63
          %s187 = scalar_select %p186, %s185, 63
          %s188 = smul.addr %s187, 4
          %s189 = smul.addr %s188, 4
          %s190 = scalar_lea.vmem %s1, %s189
          %s191 = smul.u32 16, %s12
        $region36: #{convnet_forward.5} parent=27 // pred_fallthru
          _
      $region28: #{convnet_forward.5} parent=5 // pred_fallthru
        _
      %p192 = scmp.le.s32.totalorder 1, %s12
      %p193 = scmp.lt.s32.totalorder %s12, 5
      %p194 = pnand %p192, %p193
      %p195 = pneg %p194
      // Predicated region
      $region37: #{convnet_forward.5} parent=5 // pred_check
        _
      $region38: #{convnet_forward.5} parent=5 // pred_check_branch
        %197 = sbr.rel (%p194) target = $region40
      $region39: #{convnet_forward.5} parent=5 // pred_region
        %s198 = ssub.s32 %s12, 1
        %p199 = scmp.lt.s32.totalorder %s17, 3
        %s200 = scalar_select %p199, %s17, 3
        %s201 = scalar_lea.vmem %s0, %s200
        %p202 = pneg %p38
        %p203 = pneg %p35
        %s204 = smul.u32 16, %s17
        %p205 = scmp.lt.s32.totalorder %s204, 63
        %s206 = scalar_select %p205, %s204, 63
        %s207 = smul.addr %s206, 4
        %s208 = smul.addr %s207, 4
        %s209 = scalar_lea.vmem %s1, %s208
        %p210 = pneg %p64
        %p211 = pneg %p61
        %p212 = pneg %p85
        %p213 = pneg %p82
        %p214 = pneg %p106
        %p215 = pneg %p103
        %p216 = pneg %p127
        %p217 = pneg %p124
        %p218 = pneg %p148
        %p219 = pneg %p145
        %p220 = scmp.lt.s32.totalorder %s17, 3
        %s221 = scalar_select %p220, %s17, 3
        %s222 = scalar_lea.vmem %s0, %s221
        %s223 = smul.u32 16, %s17
        %p224 = scmp.lt.s32.totalorder %s223, 63
        %s225 = scalar_select %p224, %s223, 63
        %s226 = smul.addr %s225, 4
        %s227 = smul.addr %s226, 4
        %s228 = scalar_lea.vmem %s1, %s227
        %s229 = smul.u32 16, %s17
        %p230 = scmp.eq.s32.totalorder %s17, 0
        // Predicated region
        $region41: #{convnet_forward.5} parent=39 // pred_check
          %p231 = pneg %p230
        $region42: #{convnet_forward.5} parent=39 // pred_check_branch
          %233 = sbr.rel (%p231) target = $region44
        $region43: #{convnet_forward.5} parent=39 // pred_region
          %234 = vst [vmem:[#allocation2] sm:$0xff] 0.0
        $region44: #{convnet_forward.5} parent=39 // pred_fallthru
          _
        %v235 = vld [vmem:[#allocation2] sm:$0xff]
        %v236 = vld [vmem:[%s222] sm:$0x1]
        %v237 = vld [vmem:[%s228] sm:$0xff]
        %v238 = vld [vmem:[%s228 + $0x8] sm:$0xff]
        %v239 = vld [vmem:[%s228 + $0x10] sm:$0xff]
        %v240 = vld [vmem:[%s228 + $0x18] sm:$0xff]
        %v241 = vld [vmem:[%s228 + $0x20] sm:$0xff]
        %v242 = vld [vmem:[%s228 + $0x28] sm:$0xff]
        %v243 = vld [vmem:[%s228 + $0x30] sm:$0xff]
        %v244 = vld [vmem:[%s228 + $0x38] sm:$0xff]
        %v245 = vld [vmem:[%s228 + $0x40] sm:$0xff]
        %v246 = vld [vmem:[%s228 + $0x48] sm:$0xff]
        %v247 = vld [vmem:[%s228 + $0x50] sm:$0xff]
        %v248 = vld [vmem:[%s228 + $0x58] sm:$0xff]
        %v249 = vld [vmem:[%s228 + $0x60] sm:$0xff]
        %v250 = vld [vmem:[%s228 + $0x68] sm:$0xff]
        %v251 = vld [vmem:[%s228 + $0x70] sm:$0xff]
        %v252 = vld [vmem:[%s228 + $0x78] sm:$0xff]
        %v253 = vld [vmem:[%s228 + $0x80] sm:$0xff]
        %v254 = vld [vmem:[%s228 + $0x88] sm:$0xff]
        %v255 = vld [vmem:[%s228 + $0x90] sm:$0xff]
        %v256 = vld [vmem:[%s228 + $0x98] sm:$0xff]
        %v257 = vld [vmem:[%s228 + $0xa0] sm:$0xff]
        %v258 = vld [vmem:[%s228 + $0xa8] sm:$0xff]
        %v259 = vld [vmem:[%s228 + $0xb0] sm:$0xff]
        %v260 = vld [vmem:[%s228 + $0xb8] sm:$0xff]
        %v261 = vld [vmem:[%s228 + $0xc0] sm:$0xff]
        %v262 = vld [vmem:[%s228 + $0xc8] sm:$0xff]
        %v263 = vld [vmem:[%s228 + $0xd0] sm:$0xff]
        %v264 = vld [vmem:[%s228 + $0xd8] sm:$0xff]
        %v265 = vld [vmem:[%s228 + $0xe0] sm:$0xff]
        %v266 = vld [vmem:[%s228 + $0xe8] sm:$0xff]
        %v267 = vld [vmem:[%s228 + $0xf0] sm:$0xff]
        %v268 = vld [vmem:[%s228 + $0xf8] sm:$0xff]
        %v301 = vunpack.c.l.b16 %v237
        %v302 = vunpack.c.h.b16 %v237
        %v303 = vunpack.c.l.b16 %v238
        %v304 = vunpack.c.h.b16 %v238
        %v305 = vunpack.c.l.b16 %v239
        %v306 = vunpack.c.h.b16 %v239
        %v307 = vunpack.c.l.b16 %v240
        %v308 = vunpack.c.h.b16 %v240
        %v309 = vunpack.c.l.b16 %v241
        %v310 = vunpack.c.h.b16 %v241
        %v311 = vunpack.c.l.b16 %v242
        %v312 = vunpack.c.h.b16 %v242
        %v313 = vunpack.c.l.b16 %v243
        %v314 = vunpack.c.h.b16 %v243
        %v315 = vunpack.c.l.b16 %v244
        %v316 = vunpack.c.h.b16 %v244
        %v317 = vunpack.c.l.b16 %v245
        %v318 = vunpack.c.h.b16 %v245
        %v319 = vunpack.c.l.b16 %v246
        %v320 = vunpack.c.h.b16 %v246
        %v321 = vunpack.c.l.b16 %v247
        %v322 = vunpack.c.h.b16 %v247
        %v323 = vunpack.c.l.b16 %v248
        %v324 = vunpack.c.h.b16 %v248
        %v325 = vunpack.c.l.b16 %v249
        %v326 = vunpack.c.h.b16 %v249
        %v327 = vunpack.c.l.b16 %v250
        %v328 = vunpack.c.h.b16 %v250
        %v329 = vunpack.c.l.b16 %v251
        %v330 = vunpack.c.h.b16 %v251
        %v331 = vunpack.c.l.b16 %v252
        %v332 = vunpack.c.h.b16 %v252
        %v333 = vunpack.c.l.b16 %v253
        %v334 = vunpack.c.h.b16 %v253
        %v335 = vunpack.c.l.b16 %v254
        %v336 = vunpack.c.h.b16 %v254
        %v337 = vunpack.c.l.b16 %v255
        %v338 = vunpack.c.h.b16 %v255
        %v339 = vunpack.c.l.b16 %v256
        %v340 = vunpack.c.h.b16 %v256
        %v341 = vunpack.c.l.b16 %v257
        %v342 = vunpack.c.h.b16 %v257
        %v343 = vunpack.c.l.b16 %v258
        %v344 = vunpack.c.h.b16 %v258
        %v345 = vunpack.c.l.b16 %v259
        %v346 = vunpack.c.h.b16 %v259
        %v347 = vunpack.c.l.b16 %v260
        %v348 = vunpack.c.h.b16 %v260
        %v349 = vunpack.c.l.b16 %v261
        %v350 = vunpack.c.h.b16 %v261
        %v351 = vunpack.c.l.b16 %v262
        %v352 = vunpack.c.h.b16 %v262
        %v353 = vunpack.c.l.b16 %v263
        %v354 = vunpack.c.h.b16 %v263
        %v355 = vunpack.c.l.b16 %v264
        %v356 = vunpack.c.h.b16 %v264
        %v357 = vunpack.c.l.b16 %v265
        %v358 = vunpack.c.h.b16 %v265
        %v359 = vunpack.c.l.b16 %v266
        %v360 = vunpack.c.h.b16 %v266
        %v361 = vunpack.c.l.b16 %v267
        %v362 = vunpack.c.h.b16 %v267
        %v363 = vunpack.c.l.b16 %v268
        %v364 = vunpack.c.h.b16 %v268
        %v365 = vpack.c.b16 %v305, %v301
        %v366 = vpack.c.b16 %v306, %v302
        %v367 = vpack.c.b16 %v307, %v303
        %v368 = vpack.c.b16 %v308, %v304
        %v369 = vpack.c.b16 %v313, %v309
        %v370 = vpack.c.b16 %v314, %v310
        %v371 = vpack.c.b16 %v315, %v311
        %v372 = vpack.c.b16 %v316, %v312
        %v373 = vpack.c.b16 %v321, %v317
        %v374 = vpack.c.b16 %v322, %v318
        %v375 = vpack.c.b16 %v323, %v319
        %v376 = vpack.c.b16 %v324, %v320
        %v377 = vpack.c.b16 %v329, %v325
        %v378 = vpack.c.b16 %v330, %v326
        %v379 = vpack.c.b16 %v331, %v327
        %v380 = vpack.c.b16 %v332, %v328
        %v381 = vpack.c.b16 %v337, %v333
        %v382 = vpack.c.b16 %v338, %v334
        %v383 = vpack.c.b16 %v339, %v335
        %v384 = vpack.c.b16 %v340, %v336
        %v385 = vpack.c.b16 %v345, %v341
        %v386 = vpack.c.b16 %v346, %v342
        %v387 = vpack.c.b16 %v347, %v343
        %v388 = vpack.c.b16 %v348, %v344
        %v389 = vpack.c.b16 %v353, %v349
        %v390 = vpack.c.b16 %v354, %v350
        %v391 = vpack.c.b16 %v355, %v351
        %v392 = vpack.c.b16 %v356, %v352
        %v393 = vpack.c.b16 %v361, %v357
        %v394 = vpack.c.b16 %v362, %v358
        %v395 = vpack.c.b16 %v363, %v359
        %v396 = vpack.c.b16 %v364, %v360
        %429 = vmatpush.bf16.msra.mxu0 %v393
        %430 = vmatpush.bf16.msra.mxu0 %v389
        %431 = vmatpush.bf16.msra.mxu0 %v385
        %432 = vmatpush.bf16.msra.mxu0 %v381
        %433 = vmatpush.bf16.msra.mxu0 %v377
        %434 = vmatpush.bf16.msra.mxu0 %v373
        %435 = vmatpush.bf16.msra.mxu0 %v369
        %436 = vmatpush.bf16.msra.mxu0 %v365
        %437 = vmatmul.bf16.gmra.mxu0 %v236
        %v438 = vpop.f32.mrf.mxu0
        %v439 = vadd.f32 0.0, %v438
        %v440 = vpop.f32.mrf.mxu0
        %441 = vdwg.mxu0
        %442 = vmatpush.bf16.msra.mxu0 %v394
        %443 = vmatpush.bf16.msra.mxu0 %v390
        %444 = vmatpush.bf16.msra.mxu0 %v386
        %445 = vmatpush.bf16.msra.mxu0 %v382
        %446 = vmatpush.bf16.msra.mxu0 %v378
        %447 = vmatpush.bf16.msra.mxu0 %v374
        %448 = vmatpush.bf16.msra.mxu0 %v370
        %449 = vmatpush.bf16.msra.mxu0 %v366
        %450 = vmatmul.bf16.gmra.mxu0 %v236
        %v451 = vpop.f32.mrf.mxu0
        %v452 = vadd.f32 0.0, %v451
        %v453 = vpop.f32.mrf.mxu0
        %454 = vdwg.mxu0
        %455 = vmatpush.bf16.msra.mxu0 %v395
        %456 = vmatpush.bf16.msra.mxu0 %v391
        %457 = vmatpush.bf16.msra.mxu0 %v387
        %458 = vmatpush.bf16.msra.mxu0 %v383
        %459 = vmatpush.bf16.msra.mxu0 %v379
        %460 = vmatpush.bf16.msra.mxu0 %v375
        %461 = vmatpush.bf16.msra.mxu0 %v371
        %462 = vmatpush.bf16.msra.mxu0 %v367
        %463 = vmatmul.bf16.gmra.mxu0 %v236
        %v464 = vpop.f32.mrf.mxu0
        %v465 = vadd.f32 0.0, %v464
        %v466 = vpop.f32.mrf.mxu0
        %467 = vdwg.mxu0
        %468 = vmatpush.bf16.msra.mxu0 %v396
        %469 = vmatpush.bf16.msra.mxu0 %v392
        %470 = vmatpush.bf16.msra.mxu0 %v388
        %471 = vmatpush.bf16.msra.mxu0 %v384
        %472 = vmatpush.bf16.msra.mxu0 %v380
        %473 = vmatpush.bf16.msra.mxu0 %v376
        %474 = vmatpush.bf16.msra.mxu0 %v372
        %475 = vmatpush.bf16.msra.mxu0 %v368
        %476 = vmatmul.bf16.gmra.mxu0 %v236
        %v477 = vpop.f32.mrf.mxu0
        %v478 = vadd.f32 0.0, %v477
        %v479 = vpop.f32.mrf.mxu0
        %480 = vdwg.mxu0
        %v485 = vrot.slane %v452, 6
        %v486 = vrot.slane %v465, 4
        %v487 = vrot.slane %v478, 2
        %vm488 = vcmask 1041408
        %v489 = vsel %vm488, %v439, %v485
        %vm490 = vcmask 1045508
        %v491 = vsel %vm490, %v486, %v487
        %vm492 = vcmask 1043456
        %v493 = vsel %vm492, %v489, %v491
        %v495 = vadd.f32 %v235, %v493
        %496 = vst [vmem:[#allocation2] sm:$0xff] %v495
        %p497 = scmp.eq.s32.totalorder %s17, 3
        // Predicated region
        $region45: #{convnet_forward.5} parent=39 // pred_check
          %p498 = pneg %p497
        $region46: #{convnet_forward.5} parent=39 // pred_check_branch
          %500 = sbr.rel (%p498) target = $region48
        $region47: #{convnet_forward.5} parent=39 // pred_region
          %v501 = vld [vmem:[#allocation2] sm:$0xff]
          %v502 = vld [vmem:[%s2] sm:$0xf]
          %v504 = vperm.slane %v502, 0
          %v505 = vperm.slane %v502, 1
          %v506 = vperm.slane %v502, 2
          %v507 = vperm.slane %v502, 3
          %v508 = vrot.slane %v505, 6
          %v509 = vrot.slane %v506, 4
          %v510 = vrot.slane %v507, 2
          %v511 = vsel %vm488, %v504, %v508
          %v512 = vsel %vm490, %v509, %v510
          %v513 = vsel %vm492, %v511, %v512
          %v515 = vadd.f32 %v501, %v513
          %v516 = vmax.f32 %v515, 0.0
          %518 = vst [vmem:[#allocation1] ss:$4 sm:$0xff] %v516
          %v519 = vld.sshfl [vmem:[#allocation1] sm:$0xff pattern:$0x73625140]
          %v520 = vld.sshfl [vmem:[#allocation1 + $0x8] sm:$0xff pattern:$0x73625140]
          %v521 = vld.sshfl [vmem:[#allocation1 + $0x10] sm:$0xff pattern:$0x73625140]
          %v522 = vld.sshfl [vmem:[#allocation1 + $0x18] sm:$0xff pattern:$0x73625140]
          %v527 = vpack.c.bf16 %v519, %v519
          %v528 = vpack.c.bf16 %v520, %v520
          %v529 = vpack.c.bf16 %v521, %v521
          %v530 = vpack.c.bf16 %v522, %v522
          %v531 = vld [vmem:[%s3] sm:$0xf]
          %v532 = vld [vmem:[%s3 + $0x4] sm:$0xf]
          %v533 = vld [vmem:[%s3 + $0x8] sm:$0xf]
          %v534 = vld [vmem:[%s3 + $0xc] sm:$0xf]
          %v535 = vld [vmem:[%s3 + $0x10] sm:$0xf]
          %v536 = vld [vmem:[%s3 + $0x14] sm:$0xf]
          %v537 = vld [vmem:[%s3 + $0x18] sm:$0xf]
          %v538 = vld [vmem:[%s3 + $0x1c] sm:$0xf]
          %v539 = vld [vmem:[%s3 + $0x20] sm:$0xf]
          %v540 = vld [vmem:[%s3 + $0x24] sm:$0xf]
          %v541 = vld [vmem:[%s3 + $0x28] sm:$0xf]
          %v542 = vld [vmem:[%s3 + $0x2c] sm:$0xf]
          %v543 = vld [vmem:[%s3 + $0x30] sm:$0xf]
          %v544 = vld [vmem:[%s3 + $0x34] sm:$0xf]
          %v545 = vld [vmem:[%s3 + $0x38] sm:$0xf]
          %v546 = vld [vmem:[%s3 + $0x3c] sm:$0xf]
          %v547 = vld [vmem:[%s3 + $0x40] sm:$0xf]
          %v548 = vld [vmem:[%s3 + $0x44] sm:$0xf]
          %v549 = vld [vmem:[%s3 + $0x48] sm:$0xf]
          %v550 = vld [vmem:[%s3 + $0x4c] sm:$0xf]
          %v551 = vld [vmem:[%s3 + $0x50] sm:$0xf]
          %v552 = vld [vmem:[%s3 + $0x54] sm:$0xf]
          %v553 = vld [vmem:[%s3 + $0x58] sm:$0xf]
          %v554 = vld [vmem:[%s3 + $0x5c] sm:$0xf]
          %v555 = vld [vmem:[%s3 + $0x60] sm:$0xf]
          %v556 = vld [vmem:[%s3 + $0x64] sm:$0xf]
          %v557 = vld [vmem:[%s3 + $0x68] sm:$0xf]
          %v558 = vld [vmem:[%s3 + $0x6c] sm:$0xf]
          %v559 = vld [vmem:[%s3 + $0x70] sm:$0xf]
          %v560 = vld [vmem:[%s3 + $0x74] sm:$0xf]
          %v561 = vld [vmem:[%s3 + $0x78] sm:$0xf]
          %v562 = vld [vmem:[%s3 + $0x7c] sm:$0xf]
          %v563 = vld [vmem:[%s3 + $0x80] sm:$0xf]
          %v564 = vld [vmem:[%s3 + $0x84] sm:$0xf]
          %v565 = vld [vmem:[%s3 + $0x88] sm:$0xf]
          %v566 = vld [vmem:[%s3 + $0x8c] sm:$0xf]
          %v567 = vld [vmem:[%s3 + $0x90] sm:$0xf]
          %v568 = vld [vmem:[%s3 + $0x94] sm:$0xf]
          %v569 = vld [vmem:[%s3 + $0x98] sm:$0xf]
          %v570 = vld [vmem:[%s3 + $0x9c] sm:$0xf]
          %v571 = vld [vmem:[%s3 + $0xa0] sm:$0xf]
          %v572 = vld [vmem:[%s3 + $0xa4] sm:$0xf]
          %v573 = vld [vmem:[%s3 + $0xa8] sm:$0xf]
          %v574 = vld [vmem:[%s3 + $0xac] sm:$0xf]
          %v575 = vld [vmem:[%s3 + $0xb0] sm:$0xf]
          %v576 = vld [vmem:[%s3 + $0xb4] sm:$0xf]
          %v577 = vld [vmem:[%s3 + $0xb8] sm:$0xf]
          %v578 = vld [vmem:[%s3 + $0xbc] sm:$0xf]
          %v579 = vld [vmem:[%s3 + $0xc0] sm:$0xf]
          %v580 = vld [vmem:[%s3 + $0xc4] sm:$0xf]
          %v581 = vld [vmem:[%s3 + $0xc8] sm:$0xf]
          %v582 = vld [vmem:[%s3 + $0xcc] sm:$0xf]
          %v583 = vld [vmem:[%s3 + $0xd0] sm:$0xf]
          %v584 = vld [vmem:[%s3 + $0xd4] sm:$0xf]
          %v585 = vld [vmem:[%s3 + $0xd8] sm:$0xf]
          %v586 = vld [vmem:[%s3 + $0xdc] sm:$0xf]
          %v587 = vld [vmem:[%s3 + $0xe0] sm:$0xf]
          %v588 = vld [vmem:[%s3 + $0xe4] sm:$0xf]
          %v589 = vld [vmem:[%s3 + $0xe8] sm:$0xf]
          %v590 = vld [vmem:[%s3 + $0xec] sm:$0xf]
          %v591 = vld [vmem:[%s3 + $0xf0] sm:$0xf]
          %v592 = vld [vmem:[%s3 + $0xf4] sm:$0xf]
          %v593 = vld [vmem:[%s3 + $0xf8] sm:$0xf]
          %v594 = vld [vmem:[%s3 + $0xfc] sm:$0xf]
          %v595 = vld [vmem:[%s4] sm:$0x1]
          %v597 = vperm.slane %v595, 0
          %v663 = vunpack.c.l.b16 %v531
          %v664 = vunpack.c.l.b16 %v532
          %v665 = vunpack.c.l.b16 %v533
          %v666 = vunpack.c.l.b16 %v534
          %v667 = vunpack.c.l.b16 %v535
          %v668 = vunpack.c.l.b16 %v536
          %v669 = vunpack.c.l.b16 %v537
          %v670 = vunpack.c.l.b16 %v538
          %v671 = vunpack.c.l.b16 %v539
          %v672 = vunpack.c.l.b16 %v540
          %v673 = vunpack.c.l.b16 %v541
          %v674 = vunpack.c.l.b16 %v542
          %v675 = vunpack.c.l.b16 %v543
          %v676 = vunpack.c.l.b16 %v544
          %v677 = vunpack.c.l.b16 %v545
          %v678 = vunpack.c.l.b16 %v546
          %v679 = vunpack.c.l.b16 %v547
          %v680 = vunpack.c.l.b16 %v548
          %v681 = vunpack.c.l.b16 %v549
          %v682 = vunpack.c.l.b16 %v550
          %v683 = vunpack.c.l.b16 %v551
          %v684 = vunpack.c.l.b16 %v552
          %v685 = vunpack.c.l.b16 %v553
          %v686 = vunpack.c.l.b16 %v554
          %v687 = vunpack.c.l.b16 %v555
          %v688 = vunpack.c.l.b16 %v556
          %v689 = vunpack.c.l.b16 %v557
          %v690 = vunpack.c.l.b16 %v558
          %v691 = vunpack.c.l.b16 %v559
          %v692 = vunpack.c.l.b16 %v560
          %v693 = vunpack.c.l.b16 %v561
          %v694 = vunpack.c.l.b16 %v562
          %v695 = vunpack.c.l.b16 %v563
          %v696 = vunpack.c.l.b16 %v564
          %v697 = vunpack.c.l.b16 %v565
          %v698 = vunpack.c.l.b16 %v566
          %v699 = vunpack.c.l.b16 %v567
          %v700 = vunpack.c.l.b16 %v568
          %v701 = vunpack.c.l.b16 %v569
          %v702 = vunpack.c.l.b16 %v570
          %v703 = vunpack.c.l.b16 %v571
          %v704 = vunpack.c.l.b16 %v572
          %v705 = vunpack.c.l.b16 %v573
          %v706 = vunpack.c.l.b16 %v574
          %v707 = vunpack.c.l.b16 %v575
          %v708 = vunpack.c.l.b16 %v576
          %v709 = vunpack.c.l.b16 %v577
          %v710 = vunpack.c.l.b16 %v578
          %v711 = vunpack.c.l.b16 %v579
          %v712 = vunpack.c.l.b16 %v580
          %v713 = vunpack.c.l.b16 %v581
          %v714 = vunpack.c.l.b16 %v582
          %v715 = vunpack.c.l.b16 %v583
          %v716 = vunpack.c.l.b16 %v584
          %v717 = vunpack.c.l.b16 %v585
          %v718 = vunpack.c.l.b16 %v586
          %v719 = vunpack.c.l.b16 %v587
          %v720 = vunpack.c.l.b16 %v588
          %v721 = vunpack.c.l.b16 %v589
          %v722 = vunpack.c.l.b16 %v590
          %v723 = vunpack.c.l.b16 %v591
          %v724 = vunpack.c.l.b16 %v592
          %v725 = vunpack.c.l.b16 %v593
          %v726 = vunpack.c.l.b16 %v594
          %v727 = vpack.c.b16 %v664, %v663
          %v728 = vpack.c.b16 %v666, %v665
          %v729 = vpack.c.b16 %v668, %v667
          %v730 = vpack.c.b16 %v670, %v669
          %v731 = vpack.c.b16 %v672, %v671
          %v732 = vpack.c.b16 %v674, %v673
          %v733 = vpack.c.b16 %v676, %v675
          %v734 = vpack.c.b16 %v678, %v677
          %v735 = vpack.c.b16 %v680, %v679
          %v736 = vpack.c.b16 %v682, %v681
          %v737 = vpack.c.b16 %v684, %v683
          %v738 = vpack.c.b16 %v686, %v685
          %v739 = vpack.c.b16 %v688, %v687
          %v740 = vpack.c.b16 %v690, %v689
          %v741 = vpack.c.b16 %v692, %v691
          %v742 = vpack.c.b16 %v694, %v693
          %v743 = vpack.c.b16 %v696, %v695
          %v744 = vpack.c.b16 %v698, %v697
          %v745 = vpack.c.b16 %v700, %v699
          %v746 = vpack.c.b16 %v702, %v701
          %v747 = vpack.c.b16 %v704, %v703
          %v748 = vpack.c.b16 %v706, %v705
          %v749 = vpack.c.b16 %v708, %v707
          %v750 = vpack.c.b16 %v710, %v709
          %v751 = vpack.c.b16 %v712, %v711
          %v752 = vpack.c.b16 %v714, %v713
          %v753 = vpack.c.b16 %v716, %v715
          %v754 = vpack.c.b16 %v718, %v717
          %v755 = vpack.c.b16 %v720, %v719
          %v756 = vpack.c.b16 %v722, %v721
          %v757 = vpack.c.b16 %v724, %v723
          %v758 = vpack.c.b16 %v726, %v725
          %791 = vmatpush.bf16.msra.mxu0 %v734
          %792 = vmatpush.bf16.msra.mxu0 %v733
          %793 = vmatpush.bf16.msra.mxu0 %v732
          %794 = vmatpush.bf16.msra.mxu0 %v731
          %795 = vmatpush.bf16.msra.mxu0 %v730
          %796 = vmatpush.bf16.msra.mxu0 %v729
          %797 = vmatpush.bf16.msra.mxu0 %v728
          %798 = vmatpush.bf16.msra.mxu0 %v727
          %799 = vmatmul.bf16.gmra.mxu0 %v527
          %v800 = vpop.f32.mrf.mxu0
          %v801 = vadd.f32 %v597, %v800
          %v802 = vpop.f32.mrf.mxu0
          %803 = vdwg.mxu0
          %804 = vmatpush.bf16.msra.mxu0 %v742
          %805 = vmatpush.bf16.msra.mxu0 %v741
          %806 = vmatpush.bf16.msra.mxu0 %v740
          %807 = vmatpush.bf16.msra.mxu0 %v739
          %808 = vmatpush.bf16.msra.mxu0 %v738
          %809 = vmatpush.bf16.msra.mxu0 %v737
          %810 = vmatpush.bf16.msra.mxu0 %v736
          %811 = vmatpush.bf16.msra.mxu0 %v735
          %812 = vmatmul.bf16.gmra.mxu0 %v528
          %v813 = vpop.f32.mrf.mxu0
          %v814 = vadd.f32 %v801, %v813
          %v815 = vpop.f32.mrf.mxu0
          %816 = vdwg.mxu0
          %817 = vmatpush.bf16.msra.mxu0 %v750
          %818 = vmatpush.bf16.msra.mxu0 %v749
          %819 = vmatpush.bf16.msra.mxu0 %v748
          %820 = vmatpush.bf16.msra.mxu0 %v747
          %821 = vmatpush.bf16.msra.mxu0 %v746
          %822 = vmatpush.bf16.msra.mxu0 %v745
          %823 = vmatpush.bf16.msra.mxu0 %v744
          %824 = vmatpush.bf16.msra.mxu0 %v743
          %825 = vmatmul.bf16.gmra.mxu0 %v529
          %v826 = vpop.f32.mrf.mxu0
          %v827 = vadd.f32 %v814, %v826
          %v828 = vpop.f32.mrf.mxu0
          %829 = vdwg.mxu0
          %830 = vmatpush.bf16.msra.mxu0 %v758
          %831 = vmatpush.bf16.msra.mxu0 %v757
          %832 = vmatpush.bf16.msra.mxu0 %v756
          %833 = vmatpush.bf16.msra.mxu0 %v755
          %834 = vmatpush.bf16.msra.mxu0 %v754
          %835 = vmatpush.bf16.msra.mxu0 %v753
          %836 = vmatpush.bf16.msra.mxu0 %v752
          %837 = vmatpush.bf16.msra.mxu0 %v751
          %838 = vmatmul.bf16.gmra.mxu0 %v530
          %v839 = vpop.f32.mrf.mxu0
          %v840 = vadd.f32 %v827, %v839
          %v841 = vpop.f32.mrf.mxu0
          %842 = vdwg.mxu0
          %v843 = vlaneseq
          %v844 = vand.u32 %v843, 127
          %vm845 = vcmp.lt.s32.totalorder %v844, 10
          %v846 = vsel %vm845, %v840, -1e+30
          %v847 = vsel %vm488, %v846, -inf
          %848 = vmax.xlane.f32.xlu0 %v847
          %v849 = vpop.xlane.xlu0 %848
          %v850 = vsub.f32 %v846, %v849
          %v851 = vmul.f32 %v850, 1.442695
          %v852 = vpow.pop %v851
          %v853 = vsel %vm488, %v852, 0.0
          %854 = vadd.xlane.f32.xlu0 %v853
          %v855 = vpop.xlane.xlu0 %854
          %v856 = vlog2.pop %v855
          %v857 = vmul.f32 %v856, 0.6931472
          %v858 = vadd.f32 %v849, %v857
          %v859 = vsub.f32 %v846, %v858
          %860 = vst [vmem:[#allocation3] sm:$0x3] %v859
        $region48: #{convnet_forward.5} parent=39 // pred_fallthru
          _
        // Predicated region
        $region49: #{convnet_forward.5} parent=39 // pred_check
          %p861 = pneg %p145
        $region50: #{convnet_forward.5} parent=39 // pred_check_branch
          %863 = sbr.rel (%p861) target = $region52
        $region51: #{convnet_forward.5} parent=39 // pred_region
          %865 = vsyncadd [#allocation4], 0
          %s867 = sshll.u32 [#allocation3], 4
          %s868 = int_to_ptr.vmem [resolvable:$true] %s867
          %s869 = sshll.u32 %s5, 4
          %s870 = int_to_ptr.hbm [resolvable:$true] %s869
          %872 = dma.vmem_to_hbm [thread:$0]  %s868, 32, %s870, [#allocation4]
        $region52: #{convnet_forward.5} parent=39 // pred_fallthru
          _
        // Predicated region
        $region53: #{convnet_forward.5} parent=39 // pred_check
          %p873 = pneg %p145
        $region54: #{convnet_forward.5} parent=39 // pred_check_branch
          %875 = sbr.rel (%p873) target = $region56
        $region55: #{convnet_forward.5} parent=39 // pred_region
          %877 = dma.done [#allocation4], 32
        $region56: #{convnet_forward.5} parent=39 // pred_fallthru
          _
      $region40: #{convnet_forward.5} parent=5 // pred_fallthru
        _
      %p878 = scmp.le.s32.totalorder 2, %s12
      // Predicated region
      $region57: #{convnet_forward.5} parent=5 // pred_check
        %p879 = pneg %p878
      $region58: #{convnet_forward.5} parent=5 // pred_check_branch
        %881 = sbr.rel (%p879) target = $region60
      $region59: #{convnet_forward.5} parent=5 // pred_region
        %s882 = ssub.s32 %s12, 2
      $region60: #{convnet_forward.5} parent=5 // pred_fallthru
        _
    $region6: #{convnet_forward.5} parent=1 // loop_footer
      %s16 = sadd.s32 1, %s12
    $region7: #{convnet_forward.5} parent=1 // loop_footer_branch
      %11 = sbr.rel target = $region3
    $region8: #{convnet_forward.5} parent=1 // loop_exit
      _
    %883 = vsyncpa [#allocation4], 1
    %s884 = scalar_lea.sflag [#allocation4], 1
    %885 = vsyncpa %s884, 1

</llo_original>
